<compile_context>
chip_gen: v6e
topology: v6e:2x2x1
jax: 0.10.0
libtpu: 0.0.40
codegen_flags: <defaults>
</compile_context>

<pallas_src>
import functools
import math

import jax
import jax.numpy as jnp
import numpy as np
from jax.experimental import pallas as pl
from jax.experimental.pallas import tpu as pltpu


def _silu(v):
    # silu(v) = v * sigmoid(v), sigmoid(v) = 0.5 * (1 + tanh(v/2)):
    # one EUP push (tanh) per call, no divide on the VPU.
    h = jnp.asarray(0.5, v.dtype)
    return v * (h + h * jnp.tanh(v * h))


def _round_up(a, m):
    return (a + m - 1) // m * m


def _choose_batch_tile(b, batch_tile, unit):
    """Pick (tile, padded_batch): tile is a multiple of `unit`, divides padded_batch,
    and the grid has >= 2 steps whenever the padded batch spans >= 2 units, so the
    ("parallel",) batch axis can be split across both v7x TensorCores."""
    pb = _round_up(max(b, 1), unit)
    m = pb // unit
    max_units = max(1, min(max(batch_tile, unit) // unit, m))
    tu = max_units
    while tu > 1 and (m % tu != 0 or m // tu < 2):
        tu -= 1
    return tu * unit, pb


# --------------------------------- kernel ----------------------------------


def diffusion_gnn_scm_fwd_kernel(
    s_ref, c_ref,                       # SMEM (n,): per-node graph coefficients
    x_ref, t_ref,                       # batch-tiled inputs
    wxf_ref, bxf_ref,                   # fused [fc_in | head_Y-L1] x-weights / bias (f32)
    w1t_ref, w1r_ref,                   # head_Y L1: treatment rows (f32), root block
    w2_ref, b2_ref,                     # head_Y L2
    w3mu_ref, b3mu_ref,                 # head_Y L3 (mu half only)
    mu_ref,
    *, k: int, n: int, hidden: int, d_y: int, edt,
):
    f32 = jnp.float32
    wdt = w2_ref.dtype                  # dtype of the big matmul operands

    x = x_ref[...]                                                        # (TB, d_x) f32

    # One fused K=d_x matmul covering fc_in and head_Y layer-1 x-columns (+ fused bias).
    xw = jnp.dot(x, wxf_ref[...], preferred_element_type=f32) + bxf_ref[...]
    h0 = xw[:, :hidden]                                                   # (TB, H) f32
    u = xw[:, hidden:]                                                    # (TB, M) f32

    # ---- GraphScoreNet.root(x, A): accumulate over the tiny static node axis ----
    #   h1_j = silu(h0 * s_j),  root = silu(sum_j c_j * h1_j)
    h0e = h0.astype(edt)
    acc = c_ref[0].astype(edt) * _silu(h0e * s_ref[0].astype(edt))
    for j in range(1, n):                                                 # n static & tiny
        acc = acc + c_ref[j].astype(edt) * _silu(h0e * s_ref[j].astype(edt))
    root = _silu(acc)                                                     # (TB, H) edt

    # ---- head_Y layer 1: root contribution + treatment-row lookup (select chain) ----
    u = u + jnp.dot(root.astype(wdt), w1r_ref[...], preferred_element_type=f32)
    t_col = t_ref[...]                                                    # (TB, 1) int32
    row = w1t_ref[0:1, :]
    for j in range(1, k):                                                 # (k-1)-deep select
        row = jnp.where(t_col == j, w1t_ref[j:j + 1, :], row)
    u = jnp.maximum(u + row, 0.0)

    # ---- head_Y layer 2 ----
    u = jnp.maximum(
        jnp.dot(u.astype(wdt), w2_ref[...], preferred_element_type=f32) + b2_ref[...],
        0.0)

    # ---- head_Y layer 3, mu half only ----
    if d_y == 1:
        # (1, M) x (TB, M)^T -> (1, TB): result lands directly in the lane-dense
        # output layout, so the store is an unmasked full-lane vst.
        mu = jax.lax.dot_general(
            w3mu_ref[...], u, dimension_numbers=(((1,), (1,)), ((), ())),
            preferred_element_type=f32) + b3mu_ref[0]
        mu_ref[...] = mu.astype(mu_ref.dtype)                             # (1, TB)
    else:
        mu = jax.lax.dot_general(
            u, w3mu_ref[...], dimension_numbers=(((1,), (1,)), ((), ())),
            preferred_element_type=f32) + b3mu_ref[...]
        mu_ref[...] = mu.astype(mu_ref.dtype)                             # (TB, d_y)


# ------------------------------ one-time prep ------------------------------


def prepare_params(raw, *, d_x: int, k: int, d_y: int, compute_dtype=jnp.bfloat16):
    """One-time preprocessing of the module parameters for the Pallas kernel.

    Precomputes the batch-independent graph quantities, fuses the two K=d_x thin
    matmuls (fc_in + head_Y layer-1 x-columns) into one weight/bias, slices the
    concat-style head weights, transposes the mu head, and casts the large matmul
    weights to `compute_dtype` (bf16 for the v6e/v7x MXU/VPU, f32 exact / v5e).
    The fused x-weights stay f32 so the raw features are never quantized."""
    n = raw["Bp"].shape[0]
    r = n - 2
    A = jax.nn.sigmoid(raw["Bp"]) * raw["mask"]                   # (n, n)
    s = 1.0 + jnp.sum(A, axis=1) / n                              # conv1 scale per node
    c = A[r, :] / n + jax.nn.one_hot(r, n, dtype=jnp.float32)     # conv2 root combine coeffs
    cdt = compute_dtype
    wx_fused = jnp.concatenate([raw["Win"][:d_x, :], raw["W1"][:d_x, :]], axis=1)
    bx_fused = jnp.concatenate([raw["bin"], raw["b1"]], axis=1)
    return dict(
        s_node=s.astype(jnp.float32),                             # (n,)  -> SMEM
        c_node=c.astype(jnp.float32),                             # (n,)  -> SMEM
        wx_fused=wx_fused.astype(jnp.float32),                    # (d_x, H+M), f32
        bx_fused=bx_fused.astype(jnp.float32),                    # (1, H+M),   f32
        w1t=raw["W1"][d_x:d_x + k, :].astype(jnp.float32),        # (k, M): row lookup
        w1r=raw["W1"][d_x + k:, :].astype(cdt),                   # (H, M)
        w2=raw["W2"].astype(cdt),                                 # (M, M)
        b2=raw["b2"].astype(jnp.float32),
        w3mu_t=raw["W3"][:, :d_y].T.astype(jnp.float32),          # (d_y, M): mu half, transposed
        b3mu=raw["b3"][:, :d_y].astype(jnp.float32),              # (1, d_y)
    )


# --------------------------------- wrapper ----------------------------------


@functools.partial(jax.jit, static_argnames=("batch_tile",))
def diffusion_gnn_scm_forward(x, t, prepared, batch_tile: int = 512):
    """Pallas wrapper reproducing DiffusionGNN_SCM.forward(x, t)."""
    p = prepared
    B, d_x = x.shape
    k = p["w1t"].shape[0]
    hidden = p["w1r"].shape[0]
    d_y = p["w3mu_t"].shape[0]
    n = p["s_node"].shape[0]
    # bf16 weights -> do the graph-conv elementwise region in bf16 too (v6e/v7x);
    # f32 weights (exact path / v5e) -> keep elementwise math in f32.
    edt = jnp.bfloat16 if p["w2"].dtype == jnp.bfloat16 else jnp.float32

    # d_y == 1 -> lane-dense (1, pb) output, so the batch tile is a multiple of 128.
    unit = 128 if d_y == 1 else 8
    tb, pb = _choose_batch_tile(B, batch_tile, unit)

    xp = x.astype(jnp.float32)                       # keep raw features f32 (tiny stream)
    tp = t.astype(jnp.int32).reshape(B, 1)
    if pb != B:
        xp = jnp.pad(xp, ((0, pb - B), (0, 0)))
        tp = jnp.pad(tp, ((0, pb - B), (0, 0)))

    smem = pl.BlockSpec(memory_space=pltpu.MemorySpace.SMEM)
    full2 = lambda a: pl.BlockSpec(a.shape, lambda i: (0, 0))     # fetched once (const block idx)

    if d_y == 1:
        b3 = p["b3mu"].reshape(d_y)                               # scalar bias -> SMEM
        b3_spec = smem
        out_shape = jax.ShapeDtypeStruct((1, pb), jnp.float32)    # lane-dense output row
        out_spec = pl.BlockSpec((1, tb), lambda i: (0, i))
    else:
        b3 = p["b3mu"]
        b3_spec = full2(b3)
        out_shape = jax.ShapeDtypeStruct((pb, d_y), jnp.float32)
        out_spec = pl.BlockSpec((tb, d_y), lambda i: (i, 0))

    inputs = (p["s_node"], p["c_node"], xp, tp,
              p["wx_fused"], p["bx_fused"],
              p["w1t"], p["w1r"], p["w2"], p["b2"],
              p["w3mu_t"], b3)
    in_specs = [smem, smem,
                pl.BlockSpec((tb, d_x), lambda i: (i, 0)),
                pl.BlockSpec((tb, 1), lambda i: (i, 0)),
                full2(p["wx_fused"]), full2(p["bx_fused"]),
                full2(p["w1t"]), full2(p["w1r"]),
                full2(p["w2"]), full2(p["b2"]),
                full2(p["w3mu_t"]), b3_spec]

    mu = pl.pallas_call(
        functools.partial(diffusion_gnn_scm_fwd_kernel,
                          k=k, n=n, hidden=hidden, d_y=d_y, edt=edt),
        out_shape=out_shape,
        grid=(pb // tb,),
        in_specs=in_specs,
        out_specs=out_spec,
        compiler_params=pltpu.CompilerParams(
            dimension_semantics=("parallel",),          # megacore batch split on v7x
            vmem_limit_bytes=32 * 1024 * 1024),         # safe on v5e/v6e/v7x
    )(*inputs)

    if d_y == 1:
        return mu.reshape(pb)[:B]
    return mu[:B]


# ------------- parameter construction (deterministic, PyTorch-style) -------------


def _linear(key, fan_in, fan_out):
    kw, kb = jax.random.split(key)
    bound = 1.0 / math.sqrt(fan_in)
    w = jax.random.uniform(kw, (fan_in, fan_out), jnp.float32, -bound, bound)
    b = jax.random.uniform(kb, (1, fan_out), jnp.float32, -bound, bound)
    return w, b


def init_params(key, d_x, k, d_y, hidden, mlp_hidden):
    d_nodes = d_x + 2
    d_in = d_x + k + d_y                      # score_net fc_in input dim
    keys = jax.random.split(key, 4)

    mask = jnp.ones((d_nodes, d_nodes), jnp.float32)
    mask = mask.at[-1, :d_x].set(0.0)
    mask = mask * (1.0 - jnp.eye(d_nodes, dtype=jnp.float32))
    bparam = jnp.full((d_nodes, d_nodes), -10.0, jnp.float32)

    win, bin_ = _linear(keys[0], d_in, hidden)                       # score_net.fc_in
    w1, b1 = _linear(keys[1], d_x + k + hidden, mlp_hidden)          # head_Y layer 1
    w2, b2 = _linear(keys[2], mlp_hidden, mlp_hidden)                # head_Y layer 2
    w3, b3 = _linear(keys[3], mlp_hidden, 2 * d_y)                   # head_Y layer 3

    return dict(Bp=bparam, mask=mask, Win=win, bin=bin_,
                W1=w1, b1=b1, W2=w2, b2=b2, W3=w3, b3=b3)


# ---------------- pure-JAX reference (literal translation of the torch code) -------------


def reference_forward(x, t, p, *, k, d_y):
    d_nodes = p["Bp"].shape[0]
    d_x = x.shape[1]
    d_in = p["Win"].shape[0]
    A = jax.nn.sigmoid(p["Bp"]) * p["mask"]

    zeros = jnp.zeros((x.shape[0], d_in - d_x), jnp.float32)
    h = jnp.concatenate([x, zeros], axis=-1) @ p["Win"] + p["bin"]
    h = jnp.repeat(h[:, None, :], d_nodes, axis=1)

    def conv(h):
        msg = jnp.einsum("ij,bjk->bik", A, h)
        return h + msg / d_nodes

    h = jax.nn.silu(conv(h))
    h = jax.nn.silu(conv(h))
    root = h[:, -2]

    t1h = jax.nn.one_hot(t, k, dtype=jnp.float32)
    inp = jnp.concatenate([x, t1h, root], axis=-1)
    u = jax.nn.relu(inp @ p["W1"] + p["b1"])
    u = jax.nn.relu(u @ p["W2"] + p["b2"])
    out = u @ p["W3"] + p["b3"]
    mu = out[:, :d_y]
    return jnp.squeeze(mu, axis=-1) if d_y == 1 else mu


if __name__ == "__main__":
    # small shapes consistent with the module (MLP default hidden=128)
    B, d_x, k, d_y = 300, 4, 3, 1
    hidden, mlp_hidden = 128, 128

    key = jax.random.PRNGKey(0)
    kx, kt, kp = jax.random.split(key, 3)
    x = jax.random.normal(kx, (B, d_x), jnp.float32)
    t = jax.random.randint(kt, (B,), 0, k, jnp.int32)
    raw = init_params(kp, d_x, k, d_y, hidden, mlp_hidden)

    ref = jax.block_until_ready(reference_forward(x, t, raw, k=k, d_y=d_y))

    # exact f32 path; batch_tile=128 -> 3 grid steps, exercises batch padding (300 -> 384)
    prep32 = prepare_params(raw, d_x=d_x, k=k, d_y=d_y, compute_dtype=jnp.float32)
    mu32 = jax.block_until_ready(diffusion_gnn_scm_forward(x, t, prep32, batch_tile=128))
    np.testing.assert_allclose(np.asarray(mu32), np.asarray(ref), rtol=1e-3, atol=1e-3)

    # bf16 weights + bf16 graph-conv elementwise, f32 accumulation (v6e/v7x path)
    prep16 = prepare_params(raw, d_x=d_x, k=k, d_y=d_y, compute_dtype=jnp.bfloat16)
    mu16 = jax.block_until_ready(diffusion_gnn_scm_forward(x, t, prep16))
    np.testing.assert_allclose(np.asarray(mu16), np.asarray(ref), rtol=5e-2, atol=5e-2)

    # tiny-batch sanity check (single grid step, heavy padding)
    mus = jax.block_until_ready(diffusion_gnn_scm_forward(x[:12], t[:12], prep32))
    np.testing.assert_allclose(np.asarray(mus), np.asarray(ref[:12]), rtol=1e-3, atol=1e-3)

    print("KERNEL_OK")
</pallas_src>

<mosaic_0001>
module attributes {stable_mosaic.version = 11 : i64} {
  func.func @diffusion_gnn_scm_fwd_kernel(%arg0: i32, %arg1: memref<6xf32, #tpu.memory_space<smem>>, %arg2: memref<6xf32, #tpu.memory_space<smem>>, %arg3: memref<128x4xf32, #tpu.memory_space<vmem>>, %arg4: memref<128x1xi32, #tpu.memory_space<vmem>>, %arg5: memref<4x256xf32, #tpu.memory_space<vmem>>, %arg6: memref<1x256xf32, #tpu.memory_space<vmem>>, %arg7: memref<3x128xf32, #tpu.memory_space<vmem>>, %arg8: memref<128x128xf32, #tpu.memory_space<vmem>>, %arg9: memref<128x128xf32, #tpu.memory_space<vmem>>, %arg10: memref<1x128xf32, #tpu.memory_space<vmem>>, %arg11: memref<1x128xf32, #tpu.memory_space<vmem>>, %arg12: memref<1xf32, #tpu.memory_space<smem>>, %arg13: memref<1x128xf32, #tpu.memory_space<vmem>>) attributes {dimension_semantics = [#tpu.dimension_semantics<parallel>], iteration_bounds = array<i64: 3>, scalar_prefetch = 0 : i64, scratch_operands = 0 : i64, tpu.core_type = #tpu.core_type<tc>, window_params = [{transform_indices = @transform_0, window_bounds = array<i64: 6>}, {transform_indices = @transform_1, window_bounds = array<i64: 6>}, {transform_indices = @transform_2, window_bounds = array<i64: 128, 4>}, {transform_indices = @transform_3, window_bounds = array<i64: 128, 1>}, {pipeline_mode = #tpu.pipeline_mode<synchronous>, transform_indices = @transform_4, window_bounds = array<i64: 4, 256>}, {pipeline_mode = #tpu.pipeline_mode<synchronous>, transform_indices = @transform_5, window_bounds = array<i64: 1, 256>}, {pipeline_mode = #tpu.pipeline_mode<synchronous>, transform_indices = @transform_6, window_bounds = array<i64: 3, 128>}, {pipeline_mode = #tpu.pipeline_mode<synchronous>, transform_indices = @transform_7, window_bounds = array<i64: 128, 128>}, {pipeline_mode = #tpu.pipeline_mode<synchronous>, transform_indices = @transform_8, window_bounds = array<i64: 128, 128>}, {pipeline_mode = #tpu.pipeline_mode<synchronous>, transform_indices = @transform_9, window_bounds = array<i64: 1, 128>}, {pipeline_mode = #tpu.pipeline_mode<synchronous>, transform_indices = @transform_10, window_bounds = array<i64: 1, 128>}, {transform_indices = @transform_11, window_bounds = array<i64: 1>}, {transform_indices = @transform_12, window_bounds = array<i64: 1, 128>}]} {
    %c0 = arith.constant 0 : index
    %c0_0 = arith.constant 0 : index
    %0 = vector.load %arg3[%c0, %c0_0] : memref<128x4xf32, #tpu.memory_space<vmem>>, vector<128x4xf32>
    %c0_1 = arith.constant 0 : index
    %c0_2 = arith.constant 0 : index
    %1 = vector.load %arg5[%c0_1, %c0_2] : memref<4x256xf32, #tpu.memory_space<vmem>>, vector<4x256xf32>
    %cst = arith.constant dense<0.000000e+00> : vector<128x256xf32>
    %2 = tpu.matmul %0, %1, %cst {dimension_numbers = #tpu.dot_dimension_numbers<[1], [0], [0], [1], [0, 0, 1, 1], [], []>} : vector<128x4xf32>, vector<4x256xf32>, vector<128x256xf32> -> vector<128x256xf32>
    %c0_3 = arith.constant 0 : index
    %c0_4 = arith.constant 0 : index
    %3 = vector.load %arg6[%c0_3, %c0_4] : memref<1x256xf32, #tpu.memory_space<vmem>>, vector<1x256xf32>
    %4 = vector.broadcast %3 : vector<1x256xf32> to vector<128x256xf32>
    %5 = arith.addf %2, %4 : vector<128x256xf32>
    %6 = vector.extract_strided_slice %5 {offsets = [0, 0], sizes = [128, 128], strides = [1, 1]} : vector<128x256xf32> to vector<128x128xf32>
    %7 = vector.extract_strided_slice %5 {offsets = [0, 128], sizes = [128, 128], strides = [1, 1]} : vector<128x256xf32> to vector<128x128xf32>
    %c0_5 = arith.constant 0 : index
    %8 = memref.load %arg2[%c0_5] : memref<6xf32, #tpu.memory_space<smem>>
    %c0_6 = arith.constant 0 : index
    %9 = memref.load %arg1[%c0_6] : memref<6xf32, #tpu.memory_space<smem>>
    %10 = vector.broadcast %9 : f32 to vector<128x128xf32>
    %11 = arith.mulf %6, %10 : vector<128x128xf32>
    %cst_7 = arith.constant 5.000000e-01 : f32
    %12 = vector.broadcast %cst_7 : f32 to vector<128x128xf32>
    %13 = arith.mulf %11, %12 : vector<128x128xf32>
    %14 = math.tanh %13 : vector<128x128xf32>
    %cst_8 = arith.constant 5.000000e-01 : f32
    %15 = vector.broadcast %cst_8 : f32 to vector<128x128xf32>
    %16 = arith.mulf %15, %14 : vector<128x128xf32>
    %cst_9 = arith.constant 5.000000e-01 : f32
    %17 = vector.broadcast %cst_9 : f32 to vector<128x128xf32>
    %18 = arith.addf %17, %16 : vector<128x128xf32>
    %19 = arith.mulf %11, %18 : vector<128x128xf32>
    %20 = vector.broadcast %8 : f32 to vector<128x128xf32>
    %21 = arith.mulf %20, %19 : vector<128x128xf32>
    %c1 = arith.constant 1 : index
    %22 = memref.load %arg2[%c1] : memref<6xf32, #tpu.memory_space<smem>>
    %c1_10 = arith.constant 1 : index
    %23 = memref.load %arg1[%c1_10] : memref<6xf32, #tpu.memory_space<smem>>
    %24 = vector.broadcast %23 : f32 to vector<128x128xf32>
    %25 = arith.mulf %6, %24 : vector<128x128xf32>
    %cst_11 = arith.constant 5.000000e-01 : f32
    %26 = vector.broadcast %cst_11 : f32 to vector<128x128xf32>
    %27 = arith.mulf %25, %26 : vector<128x128xf32>
    %28 = math.tanh %27 : vector<128x128xf32>
    %cst_12 = arith.constant 5.000000e-01 : f32
    %29 = vector.broadcast %cst_12 : f32 to vector<128x128xf32>
    %30 = arith.mulf %29, %28 : vector<128x128xf32>
    %cst_13 = arith.constant 5.000000e-01 : f32
    %31 = vector.broadcast %cst_13 : f32 to vector<128x128xf32>
    %32 = arith.addf %31, %30 : vector<128x128xf32>
    %33 = arith.mulf %25, %32 : vector<128x128xf32>
    %34 = vector.broadcast %22 : f32 to vector<128x128xf32>
    %35 = arith.mulf %34, %33 : vector<128x128xf32>
    %36 = arith.addf %21, %35 : vector<128x128xf32>
    %c2 = arith.constant 2 : index
    %37 = memref.load %arg2[%c2] : memref<6xf32, #tpu.memory_space<smem>>
    %c2_14 = arith.constant 2 : index
    %38 = memref.load %arg1[%c2_14] : memref<6xf32, #tpu.memory_space<smem>>
    %39 = vector.broadcast %38 : f32 to vector<128x128xf32>
    %40 = arith.mulf %6, %39 : vector<128x128xf32>
    %cst_15 = arith.constant 5.000000e-01 : f32
    %41 = vector.broadcast %cst_15 : f32 to vector<128x128xf32>
    %42 = arith.mulf %40, %41 : vector<128x128xf32>
    %43 = math.tanh %42 : vector<128x128xf32>
    %cst_16 = arith.constant 5.000000e-01 : f32
    %44 = vector.broadcast %cst_16 : f32 to vector<128x128xf32>
    %45 = arith.mulf %44, %43 : vector<128x128xf32>
    %cst_17 = arith.constant 5.000000e-01 : f32
    %46 = vector.broadcast %cst_17 : f32 to vector<128x128xf32>
    %47 = arith.addf %46, %45 : vector<128x128xf32>
    %48 = arith.mulf %40, %47 : vector<128x128xf32>
    %49 = vector.broadcast %37 : f32 to vector<128x128xf32>
    %50 = arith.mulf %49, %48 : vector<128x128xf32>
    %51 = arith.addf %36, %50 : vector<128x128xf32>
    %c3 = arith.constant 3 : index
    %52 = memref.load %arg2[%c3] : memref<6xf32, #tpu.memory_space<smem>>
    %c3_18 = arith.constant 3 : index
    %53 = memref.load %arg1[%c3_18] : memref<6xf32, #tpu.memory_space<smem>>
    %54 = vector.broadcast %53 : f32 to vector<128x128xf32>
    %55 = arith.mulf %6, %54 : vector<128x128xf32>
    %cst_19 = arith.constant 5.000000e-01 : f32
    %56 = vector.broadcast %cst_19 : f32 to vector<128x128xf32>
    %57 = arith.mulf %55, %56 : vector<128x128xf32>
    %58 = math.tanh %57 : vector<128x128xf32>
    %cst_20 = arith.constant 5.000000e-01 : f32
    %59 = vector.broadcast %cst_20 : f32 to vector<128x128xf32>
    %60 = arith.mulf %59, %58 : vector<128x128xf32>
    %cst_21 = arith.constant 5.000000e-01 : f32
    %61 = vector.broadcast %cst_21 : f32 to vector<128x128xf32>
    %62 = arith.addf %61, %60 : vector<128x128xf32>
    %63 = arith.mulf %55, %62 : vector<128x128xf32>
    %64 = vector.broadcast %52 : f32 to vector<128x128xf32>
    %65 = arith.mulf %64, %63 : vector<128x128xf32>
    %66 = arith.addf %51, %65 : vector<128x128xf32>
    %c4 = arith.constant 4 : index
    %67 = memref.load %arg2[%c4] : memref<6xf32, #tpu.memory_space<smem>>
    %c4_22 = arith.constant 4 : index
    %68 = memref.load %arg1[%c4_22] : memref<6xf32, #tpu.memory_space<smem>>
    %69 = vector.broadcast %68 : f32 to vector<128x128xf32>
    %70 = arith.mulf %6, %69 : vector<128x128xf32>
    %cst_23 = arith.constant 5.000000e-01 : f32
    %71 = vector.broadcast %cst_23 : f32 to vector<128x128xf32>
    %72 = arith.mulf %70, %71 : vector<128x128xf32>
    %73 = math.tanh %72 : vector<128x128xf32>
    %cst_24 = arith.constant 5.000000e-01 : f32
    %74 = vector.broadcast %cst_24 : f32 to vector<128x128xf32>
    %75 = arith.mulf %74, %73 : vector<128x128xf32>
    %cst_25 = arith.constant 5.000000e-01 : f32
    %76 = vector.broadcast %cst_25 : f32 to vector<128x128xf32>
    %77 = arith.addf %76, %75 : vector<128x128xf32>
    %78 = arith.mulf %70, %77 : vector<128x128xf32>
    %79 = vector.broadcast %67 : f32 to vector<128x128xf32>
    %80 = arith.mulf %79, %78 : vector<128x128xf32>
    %81 = arith.addf %66, %80 : vector<128x128xf32>
    %c5 = arith.constant 5 : index
    %82 = memref.load %arg2[%c5] : memref<6xf32, #tpu.memory_space<smem>>
    %c5_26 = arith.constant 5 : index
    %83 = memref.load %arg1[%c5_26] : memref<6xf32, #tpu.memory_space<smem>>
    %84 = vector.broadcast %83 : f32 to vector<128x128xf32>
    %85 = arith.mulf %6, %84 : vector<128x128xf32>
    %cst_27 = arith.constant 5.000000e-01 : f32
    %86 = vector.broadcast %cst_27 : f32 to vector<128x128xf32>
    %87 = arith.mulf %85, %86 : vector<128x128xf32>
    %88 = math.tanh %87 : vector<128x128xf32>
    %cst_28 = arith.constant 5.000000e-01 : f32
    %89 = vector.broadcast %cst_28 : f32 to vector<128x128xf32>
    %90 = arith.mulf %89, %88 : vector<128x128xf32>
    %cst_29 = arith.constant 5.000000e-01 : f32
    %91 = vector.broadcast %cst_29 : f32 to vector<128x128xf32>
    %92 = arith.addf %91, %90 : vector<128x128xf32>
    %93 = arith.mulf %85, %92 : vector<128x128xf32>
    %94 = vector.broadcast %82 : f32 to vector<128x128xf32>
    %95 = arith.mulf %94, %93 : vector<128x128xf32>
    %96 = arith.addf %81, %95 : vector<128x128xf32>
    %cst_30 = arith.constant 5.000000e-01 : f32
    %97 = vector.broadcast %cst_30 : f32 to vector<128x128xf32>
    %98 = arith.mulf %96, %97 : vector<128x128xf32>
    %99 = math.tanh %98 : vector<128x128xf32>
    %cst_31 = arith.constant 5.000000e-01 : f32
    %100 = vector.broadcast %cst_31 : f32 to vector<128x128xf32>
    %101 = arith.mulf %100, %99 : vector<128x128xf32>
    %cst_32 = arith.constant 5.000000e-01 : f32
    %102 = vector.broadcast %cst_32 : f32 to vector<128x128xf32>
    %103 = arith.addf %102, %101 : vector<128x128xf32>
    %104 = arith.mulf %96, %103 : vector<128x128xf32>
    %c0_33 = arith.constant 0 : index
    %c0_34 = arith.constant 0 : index
    %105 = vector.load %arg8[%c0_33, %c0_34] : memref<128x128xf32, #tpu.memory_space<vmem>>, vector<128x128xf32>
    %cst_35 = arith.constant dense<0.000000e+00> : vector<128x128xf32>
    %106 = tpu.matmul %104, %105, %cst_35 {dimension_numbers = #tpu.dot_dimension_numbers<[1], [0], [0], [1], [0, 0, 1, 1], [], []>} : vector<128x128xf32>, vector<128x128xf32>, vector<128x128xf32> -> vector<128x128xf32>
    %107 = arith.addf %7, %106 : vector<128x128xf32>
    %c0_36 = arith.constant 0 : index
    %c0_37 = arith.constant 0 : index
    %108 = vector.load %arg4[%c0_36, %c0_37] : memref<128x1xi32, #tpu.memory_space<vmem>>, vector<128x1xi32>
    %c0_38 = arith.constant 0 : index
    %c0_39 = arith.constant 0 : index
    %109 = vector.load %arg7[%c0_38, %c0_39] : memref<3x128xf32, #tpu.memory_space<vmem>>, vector<1x128xf32>
    %c1_i32 = arith.constant 1 : i32
    %110 = vector.broadcast %c1_i32 : i32 to vector<128x1xi32>
    %111 = arith.cmpi eq, %108, %110 : vector<128x1xi32>
    %c1_40 = arith.constant 1 : index
    %c0_41 = arith.constant 0 : index
    %112 = vector.load %arg7[%c1_40, %c0_41] : memref<3x128xf32, #tpu.memory_space<vmem>>, vector<1x128xf32>
    %113 = vector.shape_cast %111 : vector<128x1xi1> to vector<128x1xi1>
    %114 = vector.broadcast %113 : vector<128x1xi1> to vector<128x128xi1>
    %115 = vector.shape_cast %112 : vector<1x128xf32> to vector<1x128xf32>
    %116 = vector.broadcast %115 : vector<1x128xf32> to vector<128x128xf32>
    %117 = vector.shape_cast %109 : vector<1x128xf32> to vector<1x128xf32>
    %118 = vector.broadcast %117 : vector<1x128xf32> to vector<128x128xf32>
    %119 = arith.select %114, %116, %118 : vector<128x128xi1>, vector<128x128xf32>
    %c2_i32 = arith.constant 2 : i32
    %120 = vector.broadcast %c2_i32 : i32 to vector<128x1xi32>
    %121 = arith.cmpi eq, %108, %120 : vector<128x1xi32>
    %c2_42 = arith.constant 2 : index
    %c0_43 = arith.constant 0 : index
    %122 = vector.load %arg7[%c2_42, %c0_43] : memref<3x128xf32, #tpu.memory_space<vmem>>, vector<1x128xf32>
    %123 = vector.shape_cast %121 : vector<128x1xi1> to vector<128x1xi1>
    %124 = vector.broadcast %123 : vector<128x1xi1> to vector<128x128xi1>
    %125 = vector.shape_cast %122 : vector<1x128xf32> to vector<1x128xf32>
    %126 = vector.broadcast %125 : vector<1x128xf32> to vector<128x128xf32>
    %127 = arith.select %124, %126, %119 : vector<128x128xi1>, vector<128x128xf32>
    %128 = arith.addf %107, %127 : vector<128x128xf32>
    %cst_44 = arith.constant 0.000000e+00 : f32
    %129 = vector.broadcast %cst_44 : f32 to vector<128x128xf32>
    %130 = arith.maximumf %128, %129 : vector<128x128xf32>
    %c0_45 = arith.constant 0 : index
    %c0_46 = arith.constant 0 : index
    %131 = vector.load %arg9[%c0_45, %c0_46] : memref<128x128xf32, #tpu.memory_space<vmem>>, vector<128x128xf32>
    %cst_47 = arith.constant dense<0.000000e+00> : vector<128x128xf32>
    %132 = tpu.matmul %130, %131, %cst_47 {dimension_numbers = #tpu.dot_dimension_numbers<[1], [0], [0], [1], [0, 0, 1, 1], [], []>} : vector<128x128xf32>, vector<128x128xf32>, vector<128x128xf32> -> vector<128x128xf32>
    %c0_48 = arith.constant 0 : index
    %c0_49 = arith.constant 0 : index
    %133 = vector.load %arg10[%c0_48, %c0_49] : memref<1x128xf32, #tpu.memory_space<vmem>>, vector<1x128xf32>
    %134 = vector.broadcast %133 : vector<1x128xf32> to vector<128x128xf32>
    %135 = arith.addf %132, %134 : vector<128x128xf32>
    %cst_50 = arith.constant 0.000000e+00 : f32
    %136 = vector.broadcast %cst_50 : f32 to vector<128x128xf32>
    %137 = arith.maximumf %135, %136 : vector<128x128xf32>
    %c0_51 = arith.constant 0 : index
    %c0_52 = arith.constant 0 : index
    %138 = vector.load %arg11[%c0_51, %c0_52] : memref<1x128xf32, #tpu.memory_space<vmem>>, vector<1x128xf32>
    %cst_53 = arith.constant dense<0.000000e+00> : vector<1x128xf32>
    %139 = tpu.matmul %138, %137, %cst_53 {dimension_numbers = #tpu.dot_dimension_numbers<[1], [1], [0], [0], [0, 0, 1, 0], [], []>} : vector<1x128xf32>, vector<128x128xf32>, vector<1x128xf32> -> vector<1x128xf32>
    %c0_54 = arith.constant 0 : index
    %140 = memref.load %arg12[%c0_54] : memref<1xf32, #tpu.memory_space<smem>>
    %141 = vector.broadcast %140 : f32 to vector<1x128xf32>
    %142 = arith.addf %139, %141 : vector<1x128xf32>
    %c0_55 = arith.constant 0 : index
    %c0_56 = arith.constant 0 : index
    %143 = vector.load %arg13[%c0_55, %c0_56] : memref<1x128xf32, #tpu.memory_space<vmem>>, vector<1x128xf32>
    tpu.vector_store %arg13[%c0_55, %c0_56], %142 {strides = array<i32>} : memref<1x128xf32, #tpu.memory_space<vmem>>, vector<1x128xf32>,
    return
  }
  func.func @transform_0(%arg0: i32) -> i32 {
    %c0_i32 = arith.constant 0 : i32
    %c0_i32_0 = arith.constant 0 : i32
    return %c0_i32 : i32
  }
  func.func @transform_1(%arg0: i32) -> i32 {
    %c0_i32 = arith.constant 0 : i32
    %c0_i32_0 = arith.constant 0 : i32
    return %c0_i32 : i32
  }
  func.func @transform_2(%arg0: i32) -> (i32, i32) {
    %c0_i32 = arith.constant 0 : i32
    %c0_i32_0 = arith.constant 0 : i32
    return %arg0, %c0_i32 : i32, i32
  }
  func.func @transform_3(%arg0: i32) -> (i32, i32) {
    %c0_i32 = arith.constant 0 : i32
    %c0_i32_0 = arith.constant 0 : i32
    return %arg0, %c0_i32 : i32, i32
  }
  func.func @transform_4(%arg0: i32) -> (i32, i32) {
    %c0_i32 = arith.constant 0 : i32
    %c0_i32_0 = arith.constant 0 : i32
    %c0_i32_1 = arith.constant 0 : i32
    return %c0_i32, %c0_i32_0 : i32, i32
  }
  func.func @transform_5(%arg0: i32) -> (i32, i32) {
    %c0_i32 = arith.constant 0 : i32
    %c0_i32_0 = arith.constant 0 : i32
    %c0_i32_1 = arith.constant 0 : i32
    return %c0_i32, %c0_i32_0 : i32, i32
  }
  func.func @transform_6(%arg0: i32) -> (i32, i32) {
    %c0_i32 = arith.constant 0 : i32
    %c0_i32_0 = arith.constant 0 : i32
    %c0_i32_1 = arith.constant 0 : i32
    return %c0_i32, %c0_i32_0 : i32, i32
  }
  func.func @transform_7(%arg0: i32) -> (i32, i32) {
    %c0_i32 = arith.constant 0 : i32
    %c0_i32_0 = arith.constant 0 : i32
    %c0_i32_1 = arith.constant 0 : i32
    return %c0_i32, %c0_i32_0 : i32, i32
  }
  func.func @transform_8(%arg0: i32) -> (i32, i32) {
    %c0_i32 = arith.constant 0 : i32
    %c0_i32_0 = arith.constant 0 : i32
    %c0_i32_1 = arith.constant 0 : i32
    return %c0_i32, %c0_i32_0 : i32, i32
  }
  func.func @transform_9(%arg0: i32) -> (i32, i32) {
    %c0_i32 = arith.constant 0 : i32
    %c0_i32_0 = arith.constant 0 : i32
    %c0_i32_1 = arith.constant 0 : i32
    return %c0_i32, %c0_i32_0 : i32, i32
  }
  func.func @transform_10(%arg0: i32) -> (i32, i32) {
    %c0_i32 = arith.constant 0 : i32
    %c0_i32_0 = arith.constant 0 : i32
    %c0_i32_1 = arith.constant 0 : i32
    return %c0_i32, %c0_i32_0 : i32, i32
  }
  func.func @transform_11(%arg0: i32) -> i32 {
    %c0_i32 = arith.constant 0 : i32
    %c0_i32_0 = arith.constant 0 : i32
    return %c0_i32 : i32
  }
  func.func @transform_12(%arg0: i32) -> (i32, i32) {
    %c0_i32 = arith.constant 0 : i32
    %c0_i32_0 = arith.constant 0 : i32
    return %c0_i32, %arg0 : i32, i32
  }
}

</mosaic_0001>

<llo_original>
// kernel: diffusion_gnn_scm_forward.1
$region0: #{diffusion_gnn_scm_forward.1}
  #allocation0 [shape = 'u32[]', space=smem, size = 0x4, offset = 0x4, fixed_abs, tag = 'smem constant byte address 0x4 - core index']
  #allocation1 [shape = 'u32[144,128]{1,0:T(1,128)}', space=vmem, size = 0x12000, scoped, tag = 'internal scratch']
  #allocation2 [shape = 'f32[1]{0:T(128)S(6)}', space=smem, size = 0x200, scoped, tag = 'scoped memory for diffusion_gnn_scm_forward.1']
  %s0 = inlined_call_operand.vmem [shape: f32[6], index: 0, kind: input, shape index: {}]
  %s1 = inlined_call_operand.vmem [shape: f32[6], index: 1, kind: input, shape index: {}]
  %s2 = inlined_call_operand.vmem [shape: f32[384,4], index: 2, kind: input, shape index: {}]
  %s3 = inlined_call_operand.vmem [shape: s32[384,1], index: 3, kind: input, shape index: {}]
  %s4 = inlined_call_operand.vmem [shape: f32[4,256], index: 4, kind: input, shape index: {}]
  %s5 = inlined_call_operand.vmem [shape: f32[1,256], index: 5, kind: input, shape index: {}]
  %s6 = inlined_call_operand.vmem [shape: f32[3,128], index: 6, kind: input, shape index: {}]
  %s7 = inlined_call_operand.vmem [shape: f32[128,128], index: 7, kind: input, shape index: {}]
  %s8 = inlined_call_operand.vmem [shape: f32[128,128], index: 8, kind: input, shape index: {}]
  %s9 = inlined_call_operand.vmem [shape: f32[1,128], index: 9, kind: input, shape index: {}]
  %s10 = inlined_call_operand.vmem [shape: f32[1,128], index: 10, kind: input, shape index: {}]
  %s11 = inlined_call_operand.<no memory space> [shape: f32[1], index: 11, kind: input, shape index: {}]
  %s12 = inlined_call_operand.vmem [shape: f32[1,384], index: 12, kind: output, shape index: {}]
  %s13 = sld [smem:[#allocation0]]
  $region89: #{diffusion_gnn_scm_forward.1} parent=0
    _
  %s15 = ssub.s32 1, %s13
  %s16 = scalar_select 0, %s15, %s13
  %17 = sst [smem:[#allocation2]] %s11
  $region1: #{diffusion_gnn_scm_forward.1} parent=0
    #allocation3 [shape = 'u8[512]{0}', space=smem, size = 0x200, scoped, tag = 'input window, operand 0, single buffered']
    #allocation4 [shape = 's32[2]{0}', space=sflag, size = 0x8, scoped, tag = 'scoped memory for diffusion_gnn_scm_forward.1']
    #allocation5 [shape = 'u8[512]{0}', space=smem, size = 0x200, scoped, tag = 'input window, operand 1, single buffered']
    #allocation6 [shape = 's32[1]{0}', space=sflag, size = 0x4, scoped, tag = 'scoped memory for diffusion_gnn_scm_forward.1']
    %18 = vsyncpa [#allocation4], 0
    %19 = vsyncpa [#allocation6], 0
    loop: start=0, step=1, limit=5
    $region2: #{diffusion_gnn_scm_forward.1} parent=1 // loop_pre_header
      _
    $region3: #{diffusion_gnn_scm_forward.1} parent=1 // loop_header
      %s21 = sphi 0, %s25
      %p22 = scmp.ge.s32.totalorder %s21, 5
      %s29 = sphi 0, %s29
      %s31 = sphi 0, %s29
      %s32 = sphi 0, %s31
      %s46 = sphi 0, %s32
      %s50 = sphi 0, %s50
      %s52 = sphi 0, %s50
      %s53 = sphi 0, %s52
      %s67 = sphi 0, %s53
      %s73 = sphi 0, %s75
      %s76 = sphi 0, %s73
      %s77 = sphi 0, %s76
      %s93 = sphi 0, %s77
      %s99 = sphi 0, %s101
      %s102 = sphi 0, %s99
      %s103 = sphi 0, %s102
      %s119 = sphi 0, %s103
      %s123 = sphi 0, %s123
      %s125 = sphi 0, %s123
      %s126 = sphi 0, %s125
      %s140 = sphi 0, %s126
      %s144 = sphi 0, %s144
      %s146 = sphi 0, %s144
      %s147 = sphi 0, %s146
      %s161 = sphi 0, %s147
      %s165 = sphi 0, %s165
      %s167 = sphi 0, %s165
      %s168 = sphi 0, %s167
      %s182 = sphi 0, %s168
      %s186 = sphi 0, %s186
      %s188 = sphi 0, %s186
      %s189 = sphi 0, %s188
      %s203 = sphi 0, %s189
      %s207 = sphi 0, %s207
      %s209 = sphi 0, %s207
      %s210 = sphi 0, %s209
      %s224 = sphi 0, %s210
      %s228 = sphi 0, %s228
      %s230 = sphi 0, %s228
      %s231 = sphi 0, %s230
      %s245 = sphi 0, %s231
      %s249 = sphi 0, %s249
      %s251 = sphi 0, %s249
      %s252 = sphi 0, %s251
      %s266 = sphi 0, %s252
      %s270 = sphi 0, %s270
      %s272 = sphi 0, %s270
      %s273 = sphi 0, %s272
      %s287 = sphi 0, %s273
      %s293 = sphi 0, %s295
      %s296 = sphi 0, %s293
      %s297 = sphi 0, %s296
      %s313 = sphi 0, %s297
    $region4: #{diffusion_gnn_scm_forward.1} parent=1 // loop_header_branch
      %24 = sbr.rel (%p22) target = $region8
    $region5: #{diffusion_gnn_scm_forward.1} parent=1 // loop_body
      %s26 = ssub.s32 %s21, 1
      %s27 = ssub.s32 %s21, 2
      %s28 = sadd.s32 %s21, 1
      %s30 = sadd.s32 %s29, 1
      %p33 = scmp.eq.s32.totalorder %s21, 2
      %p34 = scmp.ne.s32.totalorder %s29, %s31
      %p35 = scmp.eq.s32.totalorder %s21, 0
      %p36 = por %p34, %p35
      %p37 = scmp.ne.s32.totalorder %s29, %s31
      %p38 = scmp.eq.s32.totalorder %s26, 2
      %p39 = por %p37, %p38
      %p40 = scmp.ne.s32.totalorder %s31, %s32
      %p41 = scmp.eq.s32.totalorder %s26, 0
      %p42 = por %p40, %p41
      %p43 = scmp.ne.s32.totalorder %s31, %s32
      %p44 = scmp.eq.s32.totalorder %s27, 2
      %p45 = por %p43, %p44
      %p47 = scmp.ne.s32.totalorder %s32, %s46
      %p48 = scmp.eq.s32.totalorder %s27, 0
      %p49 = por %p47, %p48
      %s51 = sadd.s32 %s50, 1
      %p54 = scmp.eq.s32.totalorder %s21, 2
      %p55 = scmp.ne.s32.totalorder %s50, %s52
      %p56 = scmp.eq.s32.totalorder %s21, 0
      %p57 = por %p55, %p56
      %p58 = scmp.ne.s32.totalorder %s50, %s52
      %p59 = scmp.eq.s32.totalorder %s26, 2
      %p60 = por %p58, %p59
      %p61 = scmp.ne.s32.totalorder %s52, %s53
      %p62 = scmp.eq.s32.totalorder %s26, 0
      %p63 = por %p61, %p62
      %p64 = scmp.ne.s32.totalorder %s52, %s53
      %p65 = scmp.eq.s32.totalorder %s27, 2
      %p66 = por %p64, %p65
      %p68 = scmp.ne.s32.totalorder %s53, %s67
      %p69 = scmp.eq.s32.totalorder %s27, 0
      %p70 = por %p68, %p69
      %s71 = ssub.s32 %s21, %s28
      %p72 = scmp.eq.s32.totalorder %s71, 0
      %s74 = sadd.s32 %s73, 1
      %s75 = scalar_select %p72, %s73, %s74
      %p78 = pneg %p72
      %p79 = scmp.eq.s32.totalorder %s21, 2
      %p80 = por %p78, %p79
      %p81 = scmp.ne.s32.totalorder %s73, %s76
      %p82 = scmp.eq.s32.totalorder %s21, 0
      %p83 = por %p81, %p82
      %p84 = scmp.ne.s32.totalorder %s73, %s76
      %p85 = scmp.eq.s32.totalorder %s26, 2
      %p86 = por %p84, %p85
      %p87 = scmp.ne.s32.totalorder %s76, %s77
      %p88 = scmp.eq.s32.totalorder %s26, 0
      %p89 = por %p87, %p88
      %p90 = scmp.ne.s32.totalorder %s76, %s77
      %p91 = scmp.eq.s32.totalorder %s27, 2
      %p92 = por %p90, %p91
      %p94 = scmp.ne.s32.totalorder %s77, %s93
      %p95 = scmp.eq.s32.totalorder %s27, 0
      %p96 = por %p94, %p95
      %s97 = ssub.s32 %s21, %s28
      %p98 = scmp.eq.s32.totalorder %s97, 0
      %s100 = sadd.s32 %s99, 1
      %s101 = scalar_select %p98, %s99, %s100
      %p104 = pneg %p98
      %p105 = scmp.eq.s32.totalorder %s21, 2
      %p106 = por %p104, %p105
      %p107 = scmp.ne.s32.totalorder %s99, %s102
      %p108 = scmp.eq.s32.totalorder %s21, 0
      %p109 = por %p107, %p108
      %p110 = scmp.ne.s32.totalorder %s99, %s102
      %p111 = scmp.eq.s32.totalorder %s26, 2
      %p112 = por %p110, %p111
      %p113 = scmp.ne.s32.totalorder %s102, %s103
      %p114 = scmp.eq.s32.totalorder %s26, 0
      %p115 = por %p113, %p114
      %p116 = scmp.ne.s32.totalorder %s102, %s103
      %p117 = scmp.eq.s32.totalorder %s27, 2
      %p118 = por %p116, %p117
      %p120 = scmp.ne.s32.totalorder %s103, %s119
      %p121 = scmp.eq.s32.totalorder %s27, 0
      %p122 = por %p120, %p121
      %s124 = sadd.s32 %s123, 1
      %p127 = scmp.eq.s32.totalorder %s21, 2
      %p128 = scmp.ne.s32.totalorder %s123, %s125
      %p129 = scmp.eq.s32.totalorder %s21, 0
      %p130 = por %p128, %p129
      %p131 = scmp.ne.s32.totalorder %s123, %s125
      %p132 = scmp.eq.s32.totalorder %s26, 2
      %p133 = por %p131, %p132
      %p134 = scmp.ne.s32.totalorder %s125, %s126
      %p135 = scmp.eq.s32.totalorder %s26, 0
      %p136 = por %p134, %p135
      %p137 = scmp.ne.s32.totalorder %s125, %s126
      %p138 = scmp.eq.s32.totalorder %s27, 2
      %p139 = por %p137, %p138
      %p141 = scmp.ne.s32.totalorder %s126, %s140
      %p142 = scmp.eq.s32.totalorder %s27, 0
      %p143 = por %p141, %p142
      %s145 = sadd.s32 %s144, 1
      %p148 = scmp.eq.s32.totalorder %s21, 2
      %p149 = scmp.ne.s32.totalorder %s144, %s146
      %p150 = scmp.eq.s32.totalorder %s21, 0
      %p151 = por %p149, %p150
      %p152 = scmp.ne.s32.totalorder %s144, %s146
      %p153 = scmp.eq.s32.totalorder %s26, 2
      %p154 = por %p152, %p153
      %p155 = scmp.ne.s32.totalorder %s146, %s147
      %p156 = scmp.eq.s32.totalorder %s26, 0
      %p157 = por %p155, %p156
      %p158 = scmp.ne.s32.totalorder %s146, %s147
      %p159 = scmp.eq.s32.totalorder %s27, 2
      %p160 = por %p158, %p159
      %p162 = scmp.ne.s32.totalorder %s147, %s161
      %p163 = scmp.eq.s32.totalorder %s27, 0
      %p164 = por %p162, %p163
      %s166 = sadd.s32 %s165, 1
      %p169 = scmp.eq.s32.totalorder %s21, 2
      %p170 = scmp.ne.s32.totalorder %s165, %s167
      %p171 = scmp.eq.s32.totalorder %s21, 0
      %p172 = por %p170, %p171
      %p173 = scmp.ne.s32.totalorder %s165, %s167
      %p174 = scmp.eq.s32.totalorder %s26, 2
      %p175 = por %p173, %p174
      %p176 = scmp.ne.s32.totalorder %s167, %s168
      %p177 = scmp.eq.s32.totalorder %s26, 0
      %p178 = por %p176, %p177
      %p179 = scmp.ne.s32.totalorder %s167, %s168
      %p180 = scmp.eq.s32.totalorder %s27, 2
      %p181 = por %p179, %p180
      %p183 = scmp.ne.s32.totalorder %s168, %s182
      %p184 = scmp.eq.s32.totalorder %s27, 0
      %p185 = por %p183, %p184
      %s187 = sadd.s32 %s186, 1
      %p190 = scmp.eq.s32.totalorder %s21, 2
      %p191 = scmp.ne.s32.totalorder %s186, %s188
      %p192 = scmp.eq.s32.totalorder %s21, 0
      %p193 = por %p191, %p192
      %p194 = scmp.ne.s32.totalorder %s186, %s188
      %p195 = scmp.eq.s32.totalorder %s26, 2
      %p196 = por %p194, %p195
      %p197 = scmp.ne.s32.totalorder %s188, %s189
      %p198 = scmp.eq.s32.totalorder %s26, 0
      %p199 = por %p197, %p198
      %p200 = scmp.ne.s32.totalorder %s188, %s189
      %p201 = scmp.eq.s32.totalorder %s27, 2
      %p202 = por %p200, %p201
      %p204 = scmp.ne.s32.totalorder %s189, %s203
      %p205 = scmp.eq.s32.totalorder %s27, 0
      %p206 = por %p204, %p205
      %s208 = sadd.s32 %s207, 1
      %p211 = scmp.eq.s32.totalorder %s21, 2
      %p212 = scmp.ne.s32.totalorder %s207, %s209
      %p213 = scmp.eq.s32.totalorder %s21, 0
      %p214 = por %p212, %p213
      %p215 = scmp.ne.s32.totalorder %s207, %s209
      %p216 = scmp.eq.s32.totalorder %s26, 2
      %p217 = por %p215, %p216
      %p218 = scmp.ne.s32.totalorder %s209, %s210
      %p219 = scmp.eq.s32.totalorder %s26, 0
      %p220 = por %p218, %p219
      %p221 = scmp.ne.s32.totalorder %s209, %s210
      %p222 = scmp.eq.s32.totalorder %s27, 2
      %p223 = por %p221, %p222
      %p225 = scmp.ne.s32.totalorder %s210, %s224
      %p226 = scmp.eq.s32.totalorder %s27, 0
      %p227 = por %p225, %p226
      %s229 = sadd.s32 %s228, 1
      %p232 = scmp.eq.s32.totalorder %s21, 2
      %p233 = scmp.ne.s32.totalorder %s228, %s230
      %p234 = scmp.eq.s32.totalorder %s21, 0
      %p235 = por %p233, %p234
      %p236 = scmp.ne.s32.totalorder %s228, %s230
      %p237 = scmp.eq.s32.totalorder %s26, 2
      %p238 = por %p236, %p237
      %p239 = scmp.ne.s32.totalorder %s230, %s231
      %p240 = scmp.eq.s32.totalorder %s26, 0
      %p241 = por %p239, %p240
      %p242 = scmp.ne.s32.totalorder %s230, %s231
      %p243 = scmp.eq.s32.totalorder %s27, 2
      %p244 = por %p242, %p243
      %p246 = scmp.ne.s32.totalorder %s231, %s245
      %p247 = scmp.eq.s32.totalorder %s27, 0
      %p248 = por %p246, %p247
      %s250 = sadd.s32 %s249, 1
      %p253 = scmp.eq.s32.totalorder %s21, 2
      %p254 = scmp.ne.s32.totalorder %s249, %s251
      %p255 = scmp.eq.s32.totalorder %s21, 0
      %p256 = por %p254, %p255
      %p257 = scmp.ne.s32.totalorder %s249, %s251
      %p258 = scmp.eq.s32.totalorder %s26, 2
      %p259 = por %p257, %p258
      %p260 = scmp.ne.s32.totalorder %s251, %s252
      %p261 = scmp.eq.s32.totalorder %s26, 0
      %p262 = por %p260, %p261
      %p263 = scmp.ne.s32.totalorder %s251, %s252
      %p264 = scmp.eq.s32.totalorder %s27, 2
      %p265 = por %p263, %p264
      %p267 = scmp.ne.s32.totalorder %s252, %s266
      %p268 = scmp.eq.s32.totalorder %s27, 0
      %p269 = por %p267, %p268
      %s271 = sadd.s32 %s270, 1
      %p274 = scmp.eq.s32.totalorder %s21, 2
      %p275 = scmp.ne.s32.totalorder %s270, %s272
      %p276 = scmp.eq.s32.totalorder %s21, 0
      %p277 = por %p275, %p276
      %p278 = scmp.ne.s32.totalorder %s270, %s272
      %p279 = scmp.eq.s32.totalorder %s26, 2
      %p280 = por %p278, %p279
      %p281 = scmp.ne.s32.totalorder %s272, %s273
      %p282 = scmp.eq.s32.totalorder %s26, 0
      %p283 = por %p281, %p282
      %p284 = scmp.ne.s32.totalorder %s272, %s273
      %p285 = scmp.eq.s32.totalorder %s27, 2
      %p286 = por %p284, %p285
      %p288 = scmp.ne.s32.totalorder %s273, %s287
      %p289 = scmp.eq.s32.totalorder %s27, 0
      %p290 = por %p288, %p289
      %s291 = ssub.s32 %s21, %s28
      %p292 = scmp.eq.s32.totalorder %s291, 0
      %s294 = sadd.s32 %s293, 1
      %s295 = scalar_select %p292, %s293, %s294
      %p298 = pneg %p292
      %p299 = scmp.eq.s32.totalorder %s21, 2
      %p300 = por %p298, %p299
      %p301 = scmp.ne.s32.totalorder %s293, %s296
      %p302 = scmp.eq.s32.totalorder %s21, 0
      %p303 = por %p301, %p302
      %p304 = scmp.ne.s32.totalorder %s293, %s296
      %p305 = scmp.eq.s32.totalorder %s26, 2
      %p306 = por %p304, %p305
      %p307 = scmp.ne.s32.totalorder %s296, %s297
      %p308 = scmp.eq.s32.totalorder %s26, 0
      %p309 = por %p307, %p308
      %p310 = scmp.ne.s32.totalorder %s296, %s297
      %p311 = scmp.eq.s32.totalorder %s27, 2
      %p312 = por %p310, %p311
      %p314 = scmp.ne.s32.totalorder %s297, %s313
      %p315 = scmp.eq.s32.totalorder %s27, 0
      %p316 = por %p314, %p315
      %p317 = scmp.le.s32.totalorder 1, %s21
      %p318 = scmp.lt.s32.totalorder %s21, 4
      %p319 = pnand %p317, %p318
      %p320 = pneg %p319
      // Predicated region
      $region9: #{diffusion_gnn_scm_forward.1} parent=5 // pred_check
        _
      $region10: #{diffusion_gnn_scm_forward.1} parent=5 // pred_check_branch
        %322 = sbr.rel (%p319) target = $region12
      $region11: #{diffusion_gnn_scm_forward.1} parent=5 // pred_region
        %s323 = ssub.s32 %s21, 1
        // Predicated region
        $region13: #{diffusion_gnn_scm_forward.1} parent=11 // pred_check
          %p324 = pneg %p42
        $region14: #{diffusion_gnn_scm_forward.1} parent=11 // pred_check_branch
          %326 = sbr.rel (%p324) target = $region16
        $region15: #{diffusion_gnn_scm_forward.1} parent=11 // pred_region
          %s328 = ssub.s32 16, 16
          %329 = vsyncadd [#allocation4], %s328
          %s331 = sshll.u32 %s0, 4
          %s332 = int_to_ptr.vmem [resolvable:$true] %s331
          %334 = dma.vmem_to_smem %s332, 16, [#allocation3], [#allocation4]
        $region16: #{diffusion_gnn_scm_forward.1} parent=11 // pred_fallthru
          _
        // Predicated region
        $region17: #{diffusion_gnn_scm_forward.1} parent=11 // pred_check
          %p335 = pneg %p63
        $region18: #{diffusion_gnn_scm_forward.1} parent=11 // pred_check_branch
          %337 = sbr.rel (%p335) target = $region20
        $region19: #{diffusion_gnn_scm_forward.1} parent=11 // pred_region
          %s339 = ssub.s32 16, 16
          %340 = vsyncadd [#allocation6], %s339
          %s342 = sshll.u32 %s1, 4
          %s343 = int_to_ptr.vmem [resolvable:$true] %s342
          %345 = dma.vmem_to_smem %s343, 16, [#allocation5], [#allocation6]
        $region20: #{diffusion_gnn_scm_forward.1} parent=11 // pred_fallthru
          _
        // Predicated region
        $region21: #{diffusion_gnn_scm_forward.1} parent=11 // pred_check
          %p346 = pneg %p136
        $region22: #{diffusion_gnn_scm_forward.1} parent=11 // pred_check_branch
          %348 = sbr.rel (%p346) target = $region24
        $region23: #{diffusion_gnn_scm_forward.1} parent=11 // pred_region
          _
        $region24: #{diffusion_gnn_scm_forward.1} parent=11 // pred_fallthru
          _
        // Predicated region
        $region25: #{diffusion_gnn_scm_forward.1} parent=11 // pred_check
          %p349 = pneg %p157
        $region26: #{diffusion_gnn_scm_forward.1} parent=11 // pred_check_branch
          %351 = sbr.rel (%p349) target = $region28
        $region27: #{diffusion_gnn_scm_forward.1} parent=11 // pred_region
          _
        $region28: #{diffusion_gnn_scm_forward.1} parent=11 // pred_fallthru
          _
        // Predicated region
        $region29: #{diffusion_gnn_scm_forward.1} parent=11 // pred_check
          %p352 = pneg %p178
        $region30: #{diffusion_gnn_scm_forward.1} parent=11 // pred_check_branch
          %354 = sbr.rel (%p352) target = $region32
        $region31: #{diffusion_gnn_scm_forward.1} parent=11 // pred_region
          _
        $region32: #{diffusion_gnn_scm_forward.1} parent=11 // pred_fallthru
          _
        // Predicated region
        $region33: #{diffusion_gnn_scm_forward.1} parent=11 // pred_check
          %p355 = pneg %p199
        $region34: #{diffusion_gnn_scm_forward.1} parent=11 // pred_check_branch
          %357 = sbr.rel (%p355) target = $region36
        $region35: #{diffusion_gnn_scm_forward.1} parent=11 // pred_region
          _
        $region36: #{diffusion_gnn_scm_forward.1} parent=11 // pred_fallthru
          _
        // Predicated region
        $region37: #{diffusion_gnn_scm_forward.1} parent=11 // pred_check
          %p358 = pneg %p220
        $region38: #{diffusion_gnn_scm_forward.1} parent=11 // pred_check_branch
          %360 = sbr.rel (%p358) target = $region40
        $region39: #{diffusion_gnn_scm_forward.1} parent=11 // pred_region
          _
        $region40: #{diffusion_gnn_scm_forward.1} parent=11 // pred_fallthru
          _
        // Predicated region
        $region41: #{diffusion_gnn_scm_forward.1} parent=11 // pred_check
          %p361 = pneg %p241
        $region42: #{diffusion_gnn_scm_forward.1} parent=11 // pred_check_branch
          %363 = sbr.rel (%p361) target = $region44
        $region43: #{diffusion_gnn_scm_forward.1} parent=11 // pred_region
          _
        $region44: #{diffusion_gnn_scm_forward.1} parent=11 // pred_fallthru
          _
        // Predicated region
        $region45: #{diffusion_gnn_scm_forward.1} parent=11 // pred_check
          %p364 = pneg %p262
        $region46: #{diffusion_gnn_scm_forward.1} parent=11 // pred_check_branch
          %366 = sbr.rel (%p364) target = $region48
        $region47: #{diffusion_gnn_scm_forward.1} parent=11 // pred_region
          _
        $region48: #{diffusion_gnn_scm_forward.1} parent=11 // pred_fallthru
          _
        // Predicated region
        $region49: #{diffusion_gnn_scm_forward.1} parent=11 // pred_check
          %p367 = pneg %p283
        $region50: #{diffusion_gnn_scm_forward.1} parent=11 // pred_check_branch
          %369 = sbr.rel (%p367) target = $region52
        $region51: #{diffusion_gnn_scm_forward.1} parent=11 // pred_region
          _
        $region52: #{diffusion_gnn_scm_forward.1} parent=11 // pred_fallthru
          _
      $region12: #{diffusion_gnn_scm_forward.1} parent=5 // pred_fallthru
        _
      %p370 = scmp.lt.s32.totalorder %s21, 3
      // Predicated region
      $region53: #{diffusion_gnn_scm_forward.1} parent=5 // pred_check
        %p371 = pneg %p370
      $region54: #{diffusion_gnn_scm_forward.1} parent=5 // pred_check_branch
        %373 = sbr.rel (%p371) target = $region56
      $region55: #{diffusion_gnn_scm_forward.1} parent=5 // pred_region
        // Predicated region
        $region57: #{diffusion_gnn_scm_forward.1} parent=55 // pred_check
          %p374 = pneg %p83
        $region58: #{diffusion_gnn_scm_forward.1} parent=55 // pred_check_branch
          %376 = sbr.rel (%p374) target = $region60
        $region59: #{diffusion_gnn_scm_forward.1} parent=55 // pred_region
          %s377 = smul.u32 16, %s21
          %p378 = scmp.lt.s32.totalorder %s377, 47
          %s379 = scalar_select %p378, %s377, 47
          %s380 = smul.addr %s379, 8
          %s381 = scalar_lea.vmem %s2, %s380
          %s382 = smul.u32 16, %s21
        $region60: #{diffusion_gnn_scm_forward.1} parent=55 // pred_fallthru
          _
        // Predicated region
        $region61: #{diffusion_gnn_scm_forward.1} parent=55 // pred_check
          %p383 = pneg %p109
        $region62: #{diffusion_gnn_scm_forward.1} parent=55 // pred_check_branch
          %385 = sbr.rel (%p383) target = $region64
        $region63: #{diffusion_gnn_scm_forward.1} parent=55 // pred_region
          %s386 = smul.u32 16, %s21
          %p387 = scmp.lt.s32.totalorder %s386, 47
          %s388 = scalar_select %p387, %s386, 47
          %s389 = smul.addr %s388, 8
          %s390 = scalar_lea.vmem %s3, %s389
          %s391 = smul.u32 16, %s21
        $region64: #{diffusion_gnn_scm_forward.1} parent=55 // pred_fallthru
          _
      $region56: #{diffusion_gnn_scm_forward.1} parent=5 // pred_fallthru
        _
      %p392 = scmp.le.s32.totalorder 1, %s21
      %p393 = scmp.lt.s32.totalorder %s21, 4
      %p394 = pnand %p392, %p393
      %p395 = pneg %p394
      // Predicated region
      $region65: #{diffusion_gnn_scm_forward.1} parent=5 // pred_check
        _
      $region66: #{diffusion_gnn_scm_forward.1} parent=5 // pred_check_branch
        %397 = sbr.rel (%p394) target = $region68
      $region67: #{diffusion_gnn_scm_forward.1} parent=5 // pred_region
        %s398 = ssub.s32 %s21, 1
        // Predicated region
        $region69: #{diffusion_gnn_scm_forward.1} parent=67 // pred_check
          %p399 = pneg %p42
        $region70: #{diffusion_gnn_scm_forward.1} parent=67 // pred_check_branch
          %401 = sbr.rel (%p399) target = $region72
        $region71: #{diffusion_gnn_scm_forward.1} parent=67 // pred_region
          %402 = dma.done [#allocation4], 16
        $region72: #{diffusion_gnn_scm_forward.1} parent=67 // pred_fallthru
          _
        // Predicated region
        $region73: #{diffusion_gnn_scm_forward.1} parent=67 // pred_check
          %p403 = pneg %p63
        $region74: #{diffusion_gnn_scm_forward.1} parent=67 // pred_check_branch
          %405 = sbr.rel (%p403) target = $region76
        $region75: #{diffusion_gnn_scm_forward.1} parent=67 // pred_region
          %406 = dma.done [#allocation6], 16
        $region76: #{diffusion_gnn_scm_forward.1} parent=67 // pred_fallthru
          _
        %407 = sfence
        %p408 = pneg %p42
        %p409 = pneg %p39
        %p410 = pneg %p63
        %p411 = pneg %p60
        %s412 = smul.u32 16, %s26
        %p413 = scmp.lt.s32.totalorder %s412, 47
        %s414 = scalar_select %p413, %s412, 47
        %s415 = smul.addr %s414, 8
        %s416 = scalar_lea.vmem %s2, %s415
        %p417 = pneg %p89
        %p418 = pneg %p86
        %s419 = smul.u32 16, %s26
        %p420 = scmp.lt.s32.totalorder %s419, 47
        %s421 = scalar_select %p420, %s419, 47
        %s422 = smul.addr %s421, 8
        %s423 = scalar_lea.vmem %s3, %s422
        %p424 = pneg %p115
        %p425 = pneg %p112
        %p426 = pneg %p136
        %p427 = pneg %p133
        %p428 = pneg %p157
        %p429 = pneg %p154
        %p430 = pneg %p178
        %p431 = pneg %p175
        %p432 = pneg %p199
        %p433 = pneg %p196
        %p434 = pneg %p220
        %p435 = pneg %p217
        %p436 = pneg %p241
        %p437 = pneg %p238
        %p438 = pneg %p262
        %p439 = pneg %p259
        %p440 = pneg %p283
        %p441 = pneg %p280
        %p442 = pneg %p309
        %p443 = pneg %p306
        %p444 = scmp.lt.s32.totalorder %s26, 2
        %s445 = scalar_select %p444, %s26, 2
        %s446 = scalar_lea.vmem %s12, %s445
        %s447 = smul.u32 16, %s26
        %p448 = scmp.lt.s32.totalorder %s447, 47
        %s449 = scalar_select %p448, %s447, 47
        %s450 = smul.addr %s449, 8
        %s451 = scalar_lea.vmem %s2, %s450
        %s452 = smul.u32 16, %s26
        %s453 = smul.u32 16, %s26
        %p454 = scmp.lt.s32.totalorder %s453, 47
        %s455 = scalar_select %p454, %s453, 47
        %s456 = smul.addr %s455, 8
        %s457 = scalar_lea.vmem %s3, %s456
        %s458 = smul.u32 16, %s26
        %p459 = scmp.lt.s32.totalorder %s26, 2
        %s460 = scalar_select %p459, %s26, 2
        %s461 = scalar_lea.vmem %s12, %s460
        %v462 = vld [vmem:[%s451] sm:$0xff]
        %v463 = vld [vmem:[%s451 + $0x8] sm:$0xff]
        %v464 = vld [vmem:[%s451 + $0x10] sm:$0xff]
        %v465 = vld [vmem:[%s451 + $0x18] sm:$0xff]
        %v466 = vld [vmem:[%s451 + $0x20] sm:$0xff]
        %v467 = vld [vmem:[%s451 + $0x28] sm:$0xff]
        %v468 = vld [vmem:[%s451 + $0x30] sm:$0xff]
        %v469 = vld [vmem:[%s451 + $0x38] sm:$0xff]
        %v470 = vld [vmem:[%s451 + $0x40] sm:$0xff]
        %v471 = vld [vmem:[%s451 + $0x48] sm:$0xff]
        %v472 = vld [vmem:[%s451 + $0x50] sm:$0xff]
        %v473 = vld [vmem:[%s451 + $0x58] sm:$0xff]
        %v474 = vld [vmem:[%s451 + $0x60] sm:$0xff]
        %v475 = vld [vmem:[%s451 + $0x68] sm:$0xff]
        %v476 = vld [vmem:[%s451 + $0x70] sm:$0xff]
        %v477 = vld [vmem:[%s451 + $0x78] sm:$0xff]
        %v478 = vld [vmem:[%s4] sm:$0xff]
        %v479 = vld [vmem:[%s5] sm:$0x3]
        %v481 = vlaneseq
        %v482 = vshrl.u32 %v481, 7
        %v483 = vsub.s32 0, %v482
        %v484 = vrot.slane %v479, %v483
        %v485 = vlaneseq
        %v486 = vshrl.u32 %v485, 7
        %v487 = vsub.s32 1, %v486
        %v488 = vrot.slane %v479, %v487
        %v492 = vcombine.high %v478, %v478
        %vm493 = vcmask 31744
        %v495 = vsel %vm493, %v462, 0
        %v498 = vsel %vm493, %v463, 0
        %v501 = vsel %vm493, %v464, 0
        %v504 = vsel %vm493, %v465, 0
        %v507 = vsel %vm493, %v466, 0
        %v510 = vsel %vm493, %v467, 0
        %v513 = vsel %vm493, %v468, 0
        %v516 = vsel %vm493, %v469, 0
        %v519 = vsel %vm493, %v470, 0
        %v522 = vsel %vm493, %v471, 0
        %v525 = vsel %vm493, %v472, 0
        %v528 = vsel %vm493, %v473, 0
        %v531 = vsel %vm493, %v474, 0
        %v534 = vsel %vm493, %v475, 0
        %v537 = vsel %vm493, %v476, 0
        %v540 = vsel %vm493, %v477, 0
        %vm542 = vcmask 1043456
        %v543 = vsel %vm542, %v478, 0
        %v545 = vsel %vm542, %v492, 0
        %547 = vmatprep.subr.mxu0 0.0
        %548 = vmatpush1.msra.mxu0 0.0
        %549 = vmatprep.subr.mxu0 0.0
        %550 = vmatpush1.msra.mxu0 0.0
        %551 = vmatprep.subr.mxu0 0.0
        %552 = vmatpush1.msra.mxu0 0.0
        %553 = vmatprep.subr.mxu0 0.0
        %554 = vmatpush1.msra.mxu0 0.0
        %555 = vmatprep.subr.mxu0 0.0
        %556 = vmatpush1.msra.mxu0 0.0
        %557 = vmatprep.subr.mxu0 0.0
        %558 = vmatpush1.msra.mxu0 0.0
        %559 = vmatprep.subr.mxu0 0.0
        %560 = vmatpush1.msra.mxu0 0.0
        %561 = vmatprep.subr.mxu0 0.0
        %562 = vmatpush1.msra.mxu0 0.0
        %563 = vmatprep.subr.mxu0 0.0
        %564 = vmatpush1.msra.mxu0 0.0
        %565 = vmatprep.subr.mxu0 0.0
        %566 = vmatpush1.msra.mxu0 0.0
        %567 = vmatprep.subr.mxu0 0.0
        %568 = vmatpush1.msra.mxu0 0.0
        %569 = vmatprep.subr.mxu0 0.0
        %570 = vmatpush1.msra.mxu0 0.0
        %571 = vmatprep.subr.mxu0 0.0
        %572 = vmatpush1.msra.mxu0 0.0
        %573 = vmatprep.subr.mxu0 0.0
        %574 = vmatpush1.msra.mxu0 0.0
        %575 = vmatprep.subr.mxu0 0.0
        %576 = vmatpush1.msra.mxu0 0.0
        %577 = vmatprep.subr.mxu0 %v545
        %578 = vmatpush1.msra.mxu0 %v543
        %579 = vmatprep.subr.mxu0 0.0
        %580 = vmatpush2.msra.mxu0 0.0
        %581 = vmatprep.subr.mxu0 0.0
        %582 = vmatpush2.msra.mxu0 0.0
        %583 = vmatprep.subr.mxu0 0.0
        %584 = vmatpush2.msra.mxu0 0.0
        %585 = vmatprep.subr.mxu0 0.0
        %586 = vmatpush2.msra.mxu0 0.0
        %587 = vmatprep.subr.mxu0 0.0
        %588 = vmatpush2.msra.mxu0 0.0
        %589 = vmatprep.subr.mxu0 0.0
        %590 = vmatpush2.msra.mxu0 0.0
        %591 = vmatprep.subr.mxu0 0.0
        %592 = vmatpush2.msra.mxu0 0.0
        %593 = vmatprep.subr.mxu0 0.0
        %594 = vmatpush2.msra.mxu0 0.0
        %595 = vmatprep.subr.mxu0 0.0
        %596 = vmatpush2.msra.mxu0 0.0
        %597 = vmatprep.subr.mxu0 0.0
        %598 = vmatpush2.msra.mxu0 0.0
        %599 = vmatprep.subr.mxu0 0.0
        %600 = vmatpush2.msra.mxu0 0.0
        %601 = vmatprep.subr.mxu0 0.0
        %602 = vmatpush2.msra.mxu0 0.0
        %603 = vmatprep.subr.mxu0 0.0
        %604 = vmatpush2.msra.mxu0 0.0
        %605 = vmatprep.subr.mxu0 0.0
        %606 = vmatpush2.msra.mxu0 0.0
        %607 = vmatprep.subr.mxu0 0.0
        %608 = vmatpush2.msra.mxu0 0.0
        %609 = vmatprep.subr.mxu0 0.0
        %610 = vmatpush2.msra.mxu0 0.0
        %611 = vmatprep.mubr.f32.mxu0 0.0
        %612 = vmatmul.mubr.f32.gmra.mxu0 %v495
        %v613 = vpop.f32.mrf.mxu0
        %v614 = vadd.f32 %v484, %v613
        %v615 = vpop.f32.mrf.mxu0
        %v616 = vadd.f32 %v488, %v615
        %617 = vmatprep.mubr.f32.mxu0 0.0
        %618 = vmatmul.mubr.f32.gmra.mxu0 %v498
        %v619 = vpop.f32.mrf.mxu0
        %v620 = vadd.f32 %v484, %v619
        %v621 = vpop.f32.mrf.mxu0
        %v622 = vadd.f32 %v488, %v621
        %623 = vmatprep.mubr.f32.mxu0 0.0
        %624 = vmatmul.mubr.f32.gmra.mxu0 %v501
        %v625 = vpop.f32.mrf.mxu0
        %v626 = vadd.f32 %v484, %v625
        %v627 = vpop.f32.mrf.mxu0
        %v628 = vadd.f32 %v488, %v627
        %629 = vmatprep.mubr.f32.mxu0 0.0
        %630 = vmatmul.mubr.f32.gmra.mxu0 %v504
        %v631 = vpop.f32.mrf.mxu0
        %v632 = vadd.f32 %v484, %v631
        %v633 = vpop.f32.mrf.mxu0
        %v634 = vadd.f32 %v488, %v633
        %635 = vmatprep.mubr.f32.mxu0 0.0
        %636 = vmatmul.mubr.f32.gmra.mxu0 %v507
        %v637 = vpop.f32.mrf.mxu0
        %v638 = vadd.f32 %v484, %v637
        %v639 = vpop.f32.mrf.mxu0
        %v640 = vadd.f32 %v488, %v639
        %641 = vmatprep.mubr.f32.mxu0 0.0
        %642 = vmatmul.mubr.f32.gmra.mxu0 %v510
        %v643 = vpop.f32.mrf.mxu0
        %v644 = vadd.f32 %v484, %v643
        %v645 = vpop.f32.mrf.mxu0
        %v646 = vadd.f32 %v488, %v645
        %647 = vmatprep.mubr.f32.mxu0 0.0
        %648 = vmatmul.mubr.f32.gmra.mxu0 %v513
        %v649 = vpop.f32.mrf.mxu0
        %v650 = vadd.f32 %v484, %v649
        %v651 = vpop.f32.mrf.mxu0
        %v652 = vadd.f32 %v488, %v651
        %653 = vmatprep.mubr.f32.mxu0 0.0
        %654 = vmatmul.mubr.f32.gmra.mxu0 %v516
        %v655 = vpop.f32.mrf.mxu0
        %v656 = vadd.f32 %v484, %v655
        %v657 = vpop.f32.mrf.mxu0
        %v658 = vadd.f32 %v488, %v657
        %659 = vmatprep.mubr.f32.mxu0 0.0
        %660 = vmatmul.mubr.f32.gmra.mxu0 %v519
        %v661 = vpop.f32.mrf.mxu0
        %v662 = vadd.f32 %v484, %v661
        %v663 = vpop.f32.mrf.mxu0
        %v664 = vadd.f32 %v488, %v663
        %665 = vmatprep.mubr.f32.mxu0 0.0
        %666 = vmatmul.mubr.f32.gmra.mxu0 %v522
        %v667 = vpop.f32.mrf.mxu0
        %v668 = vadd.f32 %v484, %v667
        %v669 = vpop.f32.mrf.mxu0
        %v670 = vadd.f32 %v488, %v669
        %671 = vmatprep.mubr.f32.mxu0 0.0
        %672 = vmatmul.mubr.f32.gmra.mxu0 %v525
        %v673 = vpop.f32.mrf.mxu0
        %v674 = vadd.f32 %v484, %v673
        %v675 = vpop.f32.mrf.mxu0
        %v676 = vadd.f32 %v488, %v675
        %677 = vmatprep.mubr.f32.mxu0 0.0
        %678 = vmatmul.mubr.f32.gmra.mxu0 %v528
        %v679 = vpop.f32.mrf.mxu0
        %v680 = vadd.f32 %v484, %v679
        %v681 = vpop.f32.mrf.mxu0
        %v682 = vadd.f32 %v488, %v681
        %683 = vmatprep.mubr.f32.mxu0 0.0
        %684 = vmatmul.mubr.f32.gmra.mxu0 %v531
        %v685 = vpop.f32.mrf.mxu0
        %v686 = vadd.f32 %v484, %v685
        %v687 = vpop.f32.mrf.mxu0
        %v688 = vadd.f32 %v488, %v687
        %689 = vmatprep.mubr.f32.mxu0 0.0
        %690 = vmatmul.mubr.f32.gmra.mxu0 %v534
        %v691 = vpop.f32.mrf.mxu0
        %v692 = vadd.f32 %v484, %v691
        %v693 = vpop.f32.mrf.mxu0
        %v694 = vadd.f32 %v488, %v693
        %695 = vmatprep.mubr.f32.mxu0 0.0
        %696 = vmatmul.mubr.f32.gmra.mxu0 %v537
        %v697 = vpop.f32.mrf.mxu0
        %v698 = vadd.f32 %v484, %v697
        %v699 = vpop.f32.mrf.mxu0
        %v700 = vadd.f32 %v488, %v699
        %701 = vmatprep.mubr.f32.mxu0 0.0
        %702 = vmatmul.mubr.f32.gmra.mxu0 %v540
        %v703 = vpop.f32.mrf.mxu0
        %v704 = vadd.f32 %v484, %v703
        %v705 = vpop.f32.mrf.mxu0
        %v706 = vadd.f32 %v488, %v705
        %707 = vdwg.mxu0
        %s708 = sld [smem:[#allocation5]]
        %s709 = sld [smem:[#allocation3]]
        %v710 = vstv %s709
        %v711 = vmul.f32 %v614, %v710
        %v712 = vmul.f32 %v620, %v710
        %v713 = vmul.f32 %v626, %v710
        %v714 = vmul.f32 %v632, %v710
        %v715 = vmul.f32 %v638, %v710
        %v716 = vmul.f32 %v644, %v710
        %v717 = vmul.f32 %v650, %v710
        %v718 = vmul.f32 %v656, %v710
        %v719 = vmul.f32 %v662, %v710
        %v720 = vmul.f32 %v668, %v710
        %v721 = vmul.f32 %v674, %v710
        %v722 = vmul.f32 %v680, %v710
        %v723 = vmul.f32 %v686, %v710
        %v724 = vmul.f32 %v692, %v710
        %v725 = vmul.f32 %v698, %v710
        %v726 = vmul.f32 %v704, %v710
        %v727 = vmul.f32 %v711, 0.5
        %v728 = vmul.f32 %v712, 0.5
        %v729 = vmul.f32 %v713, 0.5
        %v730 = vmul.f32 %v714, 0.5
        %v731 = vmul.f32 %v715, 0.5
        %v732 = vmul.f32 %v716, 0.5
        %v733 = vmul.f32 %v717, 0.5
        %v734 = vmul.f32 %v718, 0.5
        %v735 = vmul.f32 %v719, 0.5
        %v736 = vmul.f32 %v720, 0.5
        %v737 = vmul.f32 %v721, 0.5
        %v738 = vmul.f32 %v722, 0.5
        %v739 = vmul.f32 %v723, 0.5
        %v740 = vmul.f32 %v724, 0.5
        %v741 = vmul.f32 %v725, 0.5
        %v742 = vmul.f32 %v726, 0.5
        %v743 = vtanh.pop %v727
        %v744 = vtanh.pop %v728
        %v745 = vtanh.pop %v729
        %v746 = vtanh.pop %v730
        %v747 = vtanh.pop %v731
        %v748 = vtanh.pop %v732
        %v749 = vtanh.pop %v733
        %v750 = vtanh.pop %v734
        %v751 = vtanh.pop %v735
        %v752 = vtanh.pop %v736
        %v753 = vtanh.pop %v737
        %v754 = vtanh.pop %v738
        %v755 = vtanh.pop %v739
        %v756 = vtanh.pop %v740
        %v757 = vtanh.pop %v741
        %v758 = vtanh.pop %v742
        %v759 = vmul.f32 %v743, 0.5
        %v760 = vmul.f32 %v744, 0.5
        %v761 = vmul.f32 %v745, 0.5
        %v762 = vmul.f32 %v746, 0.5
        %v763 = vmul.f32 %v747, 0.5
        %v764 = vmul.f32 %v748, 0.5
        %v765 = vmul.f32 %v749, 0.5
        %v766 = vmul.f32 %v750, 0.5
        %v767 = vmul.f32 %v751, 0.5
        %v768 = vmul.f32 %v752, 0.5
        %v769 = vmul.f32 %v753, 0.5
        %v770 = vmul.f32 %v754, 0.5
        %v771 = vmul.f32 %v755, 0.5
        %v772 = vmul.f32 %v756, 0.5
        %v773 = vmul.f32 %v757, 0.5
        %v774 = vmul.f32 %v758, 0.5
        %v775 = vadd.f32 %v759, 0.5
        %v776 = vadd.f32 %v760, 0.5
        %v777 = vadd.f32 %v761, 0.5
        %v778 = vadd.f32 %v762, 0.5
        %v779 = vadd.f32 %v763, 0.5
        %v780 = vadd.f32 %v764, 0.5
        %v781 = vadd.f32 %v765, 0.5
        %v782 = vadd.f32 %v766, 0.5
        %v783 = vadd.f32 %v767, 0.5
        %v784 = vadd.f32 %v768, 0.5
        %v785 = vadd.f32 %v769, 0.5
        %v786 = vadd.f32 %v770, 0.5
        %v787 = vadd.f32 %v771, 0.5
        %v788 = vadd.f32 %v772, 0.5
        %v789 = vadd.f32 %v773, 0.5
        %v790 = vadd.f32 %v774, 0.5
        %v791 = vmul.f32 %v711, %v775
        %v792 = vmul.f32 %v712, %v776
        %v793 = vmul.f32 %v713, %v777
        %v794 = vmul.f32 %v714, %v778
        %v795 = vmul.f32 %v715, %v779
        %v796 = vmul.f32 %v716, %v780
        %v797 = vmul.f32 %v717, %v781
        %v798 = vmul.f32 %v718, %v782
        %v799 = vmul.f32 %v719, %v783
        %v800 = vmul.f32 %v720, %v784
        %v801 = vmul.f32 %v721, %v785
        %v802 = vmul.f32 %v722, %v786
        %v803 = vmul.f32 %v723, %v787
        %v804 = vmul.f32 %v724, %v788
        %v805 = vmul.f32 %v725, %v789
        %v806 = vmul.f32 %v726, %v790
        %v807 = vstv %s708
        %v808 = vmul.f32 %v807, %v791
        %v809 = vmul.f32 %v807, %v792
        %v810 = vmul.f32 %v807, %v793
        %v811 = vmul.f32 %v807, %v794
        %v812 = vmul.f32 %v807, %v795
        %v813 = vmul.f32 %v807, %v796
        %v814 = vmul.f32 %v807, %v797
        %v815 = vmul.f32 %v807, %v798
        %v816 = vmul.f32 %v807, %v799
        %v817 = vmul.f32 %v807, %v800
        %v818 = vmul.f32 %v807, %v801
        %v819 = vmul.f32 %v807, %v802
        %v820 = vmul.f32 %v807, %v803
        %v821 = vmul.f32 %v807, %v804
        %v822 = vmul.f32 %v807, %v805
        %v823 = vmul.f32 %v807, %v806
        %s824 = sld [smem:[#allocation5 + $0x1]]
        %s825 = sld [smem:[#allocation3 + $0x1]]
        %v826 = vstv %s825
        %v827 = vmul.f32 %v614, %v826
        %v828 = vmul.f32 %v620, %v826
        %v829 = vmul.f32 %v626, %v826
        %v830 = vmul.f32 %v632, %v826
        %v831 = vmul.f32 %v638, %v826
        %v832 = vmul.f32 %v644, %v826
        %v833 = vmul.f32 %v650, %v826
        %v834 = vmul.f32 %v656, %v826
        %v835 = vmul.f32 %v662, %v826
        %v836 = vmul.f32 %v668, %v826
        %v837 = vmul.f32 %v674, %v826
        %v838 = vmul.f32 %v680, %v826
        %v839 = vmul.f32 %v686, %v826
        %v840 = vmul.f32 %v692, %v826
        %v841 = vmul.f32 %v698, %v826
        %v842 = vmul.f32 %v704, %v826
        %v843 = vmul.f32 %v827, 0.5
        %v844 = vmul.f32 %v828, 0.5
        %v845 = vmul.f32 %v829, 0.5
        %v846 = vmul.f32 %v830, 0.5
        %v847 = vmul.f32 %v831, 0.5
        %v848 = vmul.f32 %v832, 0.5
        %v849 = vmul.f32 %v833, 0.5
        %v850 = vmul.f32 %v834, 0.5
        %v851 = vmul.f32 %v835, 0.5
        %v852 = vmul.f32 %v836, 0.5
        %v853 = vmul.f32 %v837, 0.5
        %v854 = vmul.f32 %v838, 0.5
        %v855 = vmul.f32 %v839, 0.5
        %v856 = vmul.f32 %v840, 0.5
        %v857 = vmul.f32 %v841, 0.5
        %v858 = vmul.f32 %v842, 0.5
        %v859 = vtanh.pop %v843
        %v860 = vtanh.pop %v844
        %v861 = vtanh.pop %v845
        %v862 = vtanh.pop %v846
        %v863 = vtanh.pop %v847
        %v864 = vtanh.pop %v848
        %v865 = vtanh.pop %v849
        %v866 = vtanh.pop %v850
        %v867 = vtanh.pop %v851
        %v868 = vtanh.pop %v852
        %v869 = vtanh.pop %v853
        %v870 = vtanh.pop %v854
        %v871 = vtanh.pop %v855
        %v872 = vtanh.pop %v856
        %v873 = vtanh.pop %v857
        %v874 = vtanh.pop %v858
        %v875 = vmul.f32 %v859, 0.5
        %v876 = vmul.f32 %v860, 0.5
        %v877 = vmul.f32 %v861, 0.5
        %v878 = vmul.f32 %v862, 0.5
        %v879 = vmul.f32 %v863, 0.5
        %v880 = vmul.f32 %v864, 0.5
        %v881 = vmul.f32 %v865, 0.5
        %v882 = vmul.f32 %v866, 0.5
        %v883 = vmul.f32 %v867, 0.5
        %v884 = vmul.f32 %v868, 0.5
        %v885 = vmul.f32 %v869, 0.5
        %v886 = vmul.f32 %v870, 0.5
        %v887 = vmul.f32 %v871, 0.5
        %v888 = vmul.f32 %v872, 0.5
        %v889 = vmul.f32 %v873, 0.5
        %v890 = vmul.f32 %v874, 0.5
        %v891 = vadd.f32 %v875, 0.5
        %v892 = vadd.f32 %v876, 0.5
        %v893 = vadd.f32 %v877, 0.5
        %v894 = vadd.f32 %v878, 0.5
        %v895 = vadd.f32 %v879, 0.5
        %v896 = vadd.f32 %v880, 0.5
        %v897 = vadd.f32 %v881, 0.5
        %v898 = vadd.f32 %v882, 0.5
        %v899 = vadd.f32 %v883, 0.5
        %v900 = vadd.f32 %v884, 0.5
        %v901 = vadd.f32 %v885, 0.5
        %v902 = vadd.f32 %v886, 0.5
        %v903 = vadd.f32 %v887, 0.5
        %v904 = vadd.f32 %v888, 0.5
        %v905 = vadd.f32 %v889, 0.5
        %v906 = vadd.f32 %v890, 0.5
        %v907 = vmul.f32 %v827, %v891
        %v908 = vmul.f32 %v828, %v892
        %v909 = vmul.f32 %v829, %v893
        %v910 = vmul.f32 %v830, %v894
        %v911 = vmul.f32 %v831, %v895
        %v912 = vmul.f32 %v832, %v896
        %v913 = vmul.f32 %v833, %v897
        %v914 = vmul.f32 %v834, %v898
        %v915 = vmul.f32 %v835, %v899
        %v916 = vmul.f32 %v836, %v900
        %v917 = vmul.f32 %v837, %v901
        %v918 = vmul.f32 %v838, %v902
        %v919 = vmul.f32 %v839, %v903
        %v920 = vmul.f32 %v840, %v904
        %v921 = vmul.f32 %v841, %v905
        %v922 = vmul.f32 %v842, %v906
        %v923 = vstv %s824
        %v924 = vmul.f32 %v923, %v907
        %v925 = vmul.f32 %v923, %v908
        %v926 = vmul.f32 %v923, %v909
        %v927 = vmul.f32 %v923, %v910
        %v928 = vmul.f32 %v923, %v911
        %v929 = vmul.f32 %v923, %v912
        %v930 = vmul.f32 %v923, %v913
        %v931 = vmul.f32 %v923, %v914
        %v932 = vmul.f32 %v923, %v915
        %v933 = vmul.f32 %v923, %v916
        %v934 = vmul.f32 %v923, %v917
        %v935 = vmul.f32 %v923, %v918
        %v936 = vmul.f32 %v923, %v919
        %v937 = vmul.f32 %v923, %v920
        %v938 = vmul.f32 %v923, %v921
        %v939 = vmul.f32 %v923, %v922
        %v940 = vadd.f32 %v808, %v924
        %v941 = vadd.f32 %v809, %v925
        %v942 = vadd.f32 %v810, %v926
        %v943 = vadd.f32 %v811, %v927
        %v944 = vadd.f32 %v812, %v928
        %v945 = vadd.f32 %v813, %v929
        %v946 = vadd.f32 %v814, %v930
        %v947 = vadd.f32 %v815, %v931
        %v948 = vadd.f32 %v816, %v932
        %v949 = vadd.f32 %v817, %v933
        %v950 = vadd.f32 %v818, %v934
        %v951 = vadd.f32 %v819, %v935
        %v952 = vadd.f32 %v820, %v936
        %v953 = vadd.f32 %v821, %v937
        %v954 = vadd.f32 %v822, %v938
        %v955 = vadd.f32 %v823, %v939
        %s956 = sld [smem:[#allocation5 + $0x2]]
        %s957 = sld [smem:[#allocation3 + $0x2]]
        %v958 = vstv %s957
        %v959 = vmul.f32 %v614, %v958
        %v960 = vmul.f32 %v620, %v958
        %v961 = vmul.f32 %v626, %v958
        %v962 = vmul.f32 %v632, %v958
        %v963 = vmul.f32 %v638, %v958
        %v964 = vmul.f32 %v644, %v958
        %v965 = vmul.f32 %v650, %v958
        %v966 = vmul.f32 %v656, %v958
        %v967 = vmul.f32 %v662, %v958
        %v968 = vmul.f32 %v668, %v958
        %v969 = vmul.f32 %v674, %v958
        %v970 = vmul.f32 %v680, %v958
        %v971 = vmul.f32 %v686, %v958
        %v972 = vmul.f32 %v692, %v958
        %v973 = vmul.f32 %v698, %v958
        %v974 = vmul.f32 %v704, %v958
        %v975 = vmul.f32 %v959, 0.5
        %v976 = vmul.f32 %v960, 0.5
        %v977 = vmul.f32 %v961, 0.5
        %v978 = vmul.f32 %v962, 0.5
        %v979 = vmul.f32 %v963, 0.5
        %v980 = vmul.f32 %v964, 0.5
        %v981 = vmul.f32 %v965, 0.5
        %v982 = vmul.f32 %v966, 0.5
        %v983 = vmul.f32 %v967, 0.5
        %v984 = vmul.f32 %v968, 0.5
        %v985 = vmul.f32 %v969, 0.5
        %v986 = vmul.f32 %v970, 0.5
        %v987 = vmul.f32 %v971, 0.5
        %v988 = vmul.f32 %v972, 0.5
        %v989 = vmul.f32 %v973, 0.5
        %v990 = vmul.f32 %v974, 0.5
        %v991 = vtanh.pop %v975
        %v992 = vtanh.pop %v976
        %v993 = vtanh.pop %v977
        %v994 = vtanh.pop %v978
        %v995 = vtanh.pop %v979
        %v996 = vtanh.pop %v980
        %v997 = vtanh.pop %v981
        %v998 = vtanh.pop %v982
        %v999 = vtanh.pop %v983
        %v1000 = vtanh.pop %v984
        %v1001 = vtanh.pop %v985
        %v1002 = vtanh.pop %v986
        %v1003 = vtanh.pop %v987
        %v1004 = vtanh.pop %v988
        %v1005 = vtanh.pop %v989
        %v1006 = vtanh.pop %v990
        %v1007 = vmul.f32 %v991, 0.5
        %v1008 = vmul.f32 %v992, 0.5
        %v1009 = vmul.f32 %v993, 0.5
        %v1010 = vmul.f32 %v994, 0.5
        %v1011 = vmul.f32 %v995, 0.5
        %v1012 = vmul.f32 %v996, 0.5
        %v1013 = vmul.f32 %v997, 0.5
        %v1014 = vmul.f32 %v998, 0.5
        %v1015 = vmul.f32 %v999, 0.5
        %v1016 = vmul.f32 %v1000, 0.5
        %v1017 = vmul.f32 %v1001, 0.5
        %v1018 = vmul.f32 %v1002, 0.5
        %v1019 = vmul.f32 %v1003, 0.5
        %v1020 = vmul.f32 %v1004, 0.5
        %v1021 = vmul.f32 %v1005, 0.5
        %v1022 = vmul.f32 %v1006, 0.5
        %v1023 = vadd.f32 %v1007, 0.5
        %v1024 = vadd.f32 %v1008, 0.5
        %v1025 = vadd.f32 %v1009, 0.5
        %v1026 = vadd.f32 %v1010, 0.5
        %v1027 = vadd.f32 %v1011, 0.5
        %v1028 = vadd.f32 %v1012, 0.5
        %v1029 = vadd.f32 %v1013, 0.5
        %v1030 = vadd.f32 %v1014, 0.5
        %v1031 = vadd.f32 %v1015, 0.5
        %v1032 = vadd.f32 %v1016, 0.5
        %v1033 = vadd.f32 %v1017, 0.5
        %v1034 = vadd.f32 %v1018, 0.5
        %v1035 = vadd.f32 %v1019, 0.5
        %v1036 = vadd.f32 %v1020, 0.5
        %v1037 = vadd.f32 %v1021, 0.5
        %v1038 = vadd.f32 %v1022, 0.5
        %v1039 = vmul.f32 %v959, %v1023
        %v1040 = vmul.f32 %v960, %v1024
        %v1041 = vmul.f32 %v961, %v1025
        %v1042 = vmul.f32 %v962, %v1026
        %v1043 = vmul.f32 %v963, %v1027
        %v1044 = vmul.f32 %v964, %v1028
        %v1045 = vmul.f32 %v965, %v1029
        %v1046 = vmul.f32 %v966, %v1030
        %v1047 = vmul.f32 %v967, %v1031
        %v1048 = vmul.f32 %v968, %v1032
        %v1049 = vmul.f32 %v969, %v1033
        %v1050 = vmul.f32 %v970, %v1034
        %v1051 = vmul.f32 %v971, %v1035
        %v1052 = vmul.f32 %v972, %v1036
        %v1053 = vmul.f32 %v973, %v1037
        %v1054 = vmul.f32 %v974, %v1038
        %v1055 = vstv %s956
        %v1056 = vmul.f32 %v1055, %v1039
        %v1057 = vmul.f32 %v1055, %v1040
        %v1058 = vmul.f32 %v1055, %v1041
        %v1059 = vmul.f32 %v1055, %v1042
        %v1060 = vmul.f32 %v1055, %v1043
        %v1061 = vmul.f32 %v1055, %v1044
        %v1062 = vmul.f32 %v1055, %v1045
        %v1063 = vmul.f32 %v1055, %v1046
        %v1064 = vmul.f32 %v1055, %v1047
        %v1065 = vmul.f32 %v1055, %v1048
        %v1066 = vmul.f32 %v1055, %v1049
        %v1067 = vmul.f32 %v1055, %v1050
        %v1068 = vmul.f32 %v1055, %v1051
        %v1069 = vmul.f32 %v1055, %v1052
        %v1070 = vmul.f32 %v1055, %v1053
        %v1071 = vmul.f32 %v1055, %v1054
        %v1072 = vadd.f32 %v940, %v1056
        %v1073 = vadd.f32 %v941, %v1057
        %v1074 = vadd.f32 %v942, %v1058
        %v1075 = vadd.f32 %v943, %v1059
        %v1076 = vadd.f32 %v944, %v1060
        %v1077 = vadd.f32 %v945, %v1061
        %v1078 = vadd.f32 %v946, %v1062
        %v1079 = vadd.f32 %v947, %v1063
        %v1080 = vadd.f32 %v948, %v1064
        %v1081 = vadd.f32 %v949, %v1065
        %v1082 = vadd.f32 %v950, %v1066
        %v1083 = vadd.f32 %v951, %v1067
        %v1084 = vadd.f32 %v952, %v1068
        %v1085 = vadd.f32 %v953, %v1069
        %v1086 = vadd.f32 %v954, %v1070
        %v1087 = vadd.f32 %v955, %v1071
        %s1088 = sld [smem:[#allocation5 + $0x3]]
        %s1089 = sld [smem:[#allocation3 + $0x3]]
        %v1090 = vstv %s1089
        %v1091 = vmul.f32 %v614, %v1090
        %v1092 = vmul.f32 %v620, %v1090
        %v1093 = vmul.f32 %v626, %v1090
        %v1094 = vmul.f32 %v632, %v1090
        %v1095 = vmul.f32 %v638, %v1090
        %v1096 = vmul.f32 %v644, %v1090
        %v1097 = vmul.f32 %v650, %v1090
        %v1098 = vmul.f32 %v656, %v1090
        %v1099 = vmul.f32 %v662, %v1090
        %v1100 = vmul.f32 %v668, %v1090
        %v1101 = vmul.f32 %v674, %v1090
        %v1102 = vmul.f32 %v680, %v1090
        %v1103 = vmul.f32 %v686, %v1090
        %v1104 = vmul.f32 %v692, %v1090
        %v1105 = vmul.f32 %v698, %v1090
        %v1106 = vmul.f32 %v704, %v1090
        %v1107 = vmul.f32 %v1091, 0.5
        %v1108 = vmul.f32 %v1092, 0.5
        %v1109 = vmul.f32 %v1093, 0.5
        %v1110 = vmul.f32 %v1094, 0.5
        %v1111 = vmul.f32 %v1095, 0.5
        %v1112 = vmul.f32 %v1096, 0.5
        %v1113 = vmul.f32 %v1097, 0.5
        %v1114 = vmul.f32 %v1098, 0.5
        %v1115 = vmul.f32 %v1099, 0.5
        %v1116 = vmul.f32 %v1100, 0.5
        %v1117 = vmul.f32 %v1101, 0.5
        %v1118 = vmul.f32 %v1102, 0.5
        %v1119 = vmul.f32 %v1103, 0.5
        %v1120 = vmul.f32 %v1104, 0.5
        %v1121 = vmul.f32 %v1105, 0.5
        %v1122 = vmul.f32 %v1106, 0.5
        %v1123 = vtanh.pop %v1107
        %v1124 = vtanh.pop %v1108
        %v1125 = vtanh.pop %v1109
        %v1126 = vtanh.pop %v1110
        %v1127 = vtanh.pop %v1111
        %v1128 = vtanh.pop %v1112
        %v1129 = vtanh.pop %v1113
        %v1130 = vtanh.pop %v1114
        %v1131 = vtanh.pop %v1115
        %v1132 = vtanh.pop %v1116
        %v1133 = vtanh.pop %v1117
        %v1134 = vtanh.pop %v1118
        %v1135 = vtanh.pop %v1119
        %v1136 = vtanh.pop %v1120
        %v1137 = vtanh.pop %v1121
        %v1138 = vtanh.pop %v1122
        %v1139 = vmul.f32 %v1123, 0.5
        %v1140 = vmul.f32 %v1124, 0.5
        %v1141 = vmul.f32 %v1125, 0.5
        %v1142 = vmul.f32 %v1126, 0.5
        %v1143 = vmul.f32 %v1127, 0.5
        %v1144 = vmul.f32 %v1128, 0.5
        %v1145 = vmul.f32 %v1129, 0.5
        %v1146 = vmul.f32 %v1130, 0.5
        %v1147 = vmul.f32 %v1131, 0.5
        %v1148 = vmul.f32 %v1132, 0.5
        %v1149 = vmul.f32 %v1133, 0.5
        %v1150 = vmul.f32 %v1134, 0.5
        %v1151 = vmul.f32 %v1135, 0.5
        %v1152 = vmul.f32 %v1136, 0.5
        %v1153 = vmul.f32 %v1137, 0.5
        %v1154 = vmul.f32 %v1138, 0.5
        %v1155 = vadd.f32 %v1139, 0.5
        %v1156 = vadd.f32 %v1140, 0.5
        %v1157 = vadd.f32 %v1141, 0.5
        %v1158 = vadd.f32 %v1142, 0.5
        %v1159 = vadd.f32 %v1143, 0.5
        %v1160 = vadd.f32 %v1144, 0.5
        %v1161 = vadd.f32 %v1145, 0.5
        %v1162 = vadd.f32 %v1146, 0.5
        %v1163 = vadd.f32 %v1147, 0.5
        %v1164 = vadd.f32 %v1148, 0.5
        %v1165 = vadd.f32 %v1149, 0.5
        %v1166 = vadd.f32 %v1150, 0.5
        %v1167 = vadd.f32 %v1151, 0.5
        %v1168 = vadd.f32 %v1152, 0.5
        %v1169 = vadd.f32 %v1153, 0.5
        %v1170 = vadd.f32 %v1154, 0.5
        %v1171 = vmul.f32 %v1091, %v1155
        %v1172 = vmul.f32 %v1092, %v1156
        %v1173 = vmul.f32 %v1093, %v1157
        %v1174 = vmul.f32 %v1094, %v1158
        %v1175 = vmul.f32 %v1095, %v1159
        %v1176 = vmul.f32 %v1096, %v1160
        %v1177 = vmul.f32 %v1097, %v1161
        %v1178 = vmul.f32 %v1098, %v1162
        %v1179 = vmul.f32 %v1099, %v1163
        %v1180 = vmul.f32 %v1100, %v1164
        %v1181 = vmul.f32 %v1101, %v1165
        %v1182 = vmul.f32 %v1102, %v1166
        %v1183 = vmul.f32 %v1103, %v1167
        %v1184 = vmul.f32 %v1104, %v1168
        %v1185 = vmul.f32 %v1105, %v1169
        %v1186 = vmul.f32 %v1106, %v1170
        %v1187 = vstv %s1088
        %v1188 = vmul.f32 %v1187, %v1171
        %v1189 = vmul.f32 %v1187, %v1172
        %v1190 = vmul.f32 %v1187, %v1173
        %v1191 = vmul.f32 %v1187, %v1174
        %v1192 = vmul.f32 %v1187, %v1175
        %v1193 = vmul.f32 %v1187, %v1176
        %v1194 = vmul.f32 %v1187, %v1177
        %v1195 = vmul.f32 %v1187, %v1178
        %v1196 = vmul.f32 %v1187, %v1179
        %v1197 = vmul.f32 %v1187, %v1180
        %v1198 = vmul.f32 %v1187, %v1181
        %v1199 = vmul.f32 %v1187, %v1182
        %v1200 = vmul.f32 %v1187, %v1183
        %v1201 = vmul.f32 %v1187, %v1184
        %v1202 = vmul.f32 %v1187, %v1185
        %v1203 = vmul.f32 %v1187, %v1186
        %v1204 = vadd.f32 %v1072, %v1188
        %v1205 = vadd.f32 %v1073, %v1189
        %v1206 = vadd.f32 %v1074, %v1190
        %v1207 = vadd.f32 %v1075, %v1191
        %v1208 = vadd.f32 %v1076, %v1192
        %v1209 = vadd.f32 %v1077, %v1193
        %v1210 = vadd.f32 %v1078, %v1194
        %v1211 = vadd.f32 %v1079, %v1195
        %v1212 = vadd.f32 %v1080, %v1196
        %v1213 = vadd.f32 %v1081, %v1197
        %v1214 = vadd.f32 %v1082, %v1198
        %v1215 = vadd.f32 %v1083, %v1199
        %v1216 = vadd.f32 %v1084, %v1200
        %v1217 = vadd.f32 %v1085, %v1201
        %v1218 = vadd.f32 %v1086, %v1202
        %v1219 = vadd.f32 %v1087, %v1203
        %s1220 = sld [smem:[#allocation5 + $0x4]]
        %s1221 = sld [smem:[#allocation3 + $0x4]]
        %v1222 = vstv %s1221
        %v1223 = vmul.f32 %v614, %v1222
        %v1224 = vmul.f32 %v620, %v1222
        %v1225 = vmul.f32 %v626, %v1222
        %v1226 = vmul.f32 %v632, %v1222
        %v1227 = vmul.f32 %v638, %v1222
        %v1228 = vmul.f32 %v644, %v1222
        %v1229 = vmul.f32 %v650, %v1222
        %v1230 = vmul.f32 %v656, %v1222
        %v1231 = vmul.f32 %v662, %v1222
        %v1232 = vmul.f32 %v668, %v1222
        %v1233 = vmul.f32 %v674, %v1222
        %v1234 = vmul.f32 %v680, %v1222
        %v1235 = vmul.f32 %v686, %v1222
        %v1236 = vmul.f32 %v692, %v1222
        %v1237 = vmul.f32 %v698, %v1222
        %v1238 = vmul.f32 %v704, %v1222
        %v1239 = vmul.f32 %v1223, 0.5
        %v1240 = vmul.f32 %v1224, 0.5
        %v1241 = vmul.f32 %v1225, 0.5
        %v1242 = vmul.f32 %v1226, 0.5
        %v1243 = vmul.f32 %v1227, 0.5
        %v1244 = vmul.f32 %v1228, 0.5
        %v1245 = vmul.f32 %v1229, 0.5
        %v1246 = vmul.f32 %v1230, 0.5
        %v1247 = vmul.f32 %v1231, 0.5
        %v1248 = vmul.f32 %v1232, 0.5
        %v1249 = vmul.f32 %v1233, 0.5
        %v1250 = vmul.f32 %v1234, 0.5
        %v1251 = vmul.f32 %v1235, 0.5
        %v1252 = vmul.f32 %v1236, 0.5
        %v1253 = vmul.f32 %v1237, 0.5
        %v1254 = vmul.f32 %v1238, 0.5
        %v1255 = vtanh.pop %v1239
        %v1256 = vtanh.pop %v1240
        %v1257 = vtanh.pop %v1241
        %v1258 = vtanh.pop %v1242
        %v1259 = vtanh.pop %v1243
        %v1260 = vtanh.pop %v1244
        %v1261 = vtanh.pop %v1245
        %v1262 = vtanh.pop %v1246
        %v1263 = vtanh.pop %v1247
        %v1264 = vtanh.pop %v1248
        %v1265 = vtanh.pop %v1249
        %v1266 = vtanh.pop %v1250
        %v1267 = vtanh.pop %v1251
        %v1268 = vtanh.pop %v1252
        %v1269 = vtanh.pop %v1253
        %v1270 = vtanh.pop %v1254
        %v1271 = vmul.f32 %v1255, 0.5
        %v1272 = vmul.f32 %v1256, 0.5
        %v1273 = vmul.f32 %v1257, 0.5
        %v1274 = vmul.f32 %v1258, 0.5
        %v1275 = vmul.f32 %v1259, 0.5
        %v1276 = vmul.f32 %v1260, 0.5
        %v1277 = vmul.f32 %v1261, 0.5
        %v1278 = vmul.f32 %v1262, 0.5
        %v1279 = vmul.f32 %v1263, 0.5
        %v1280 = vmul.f32 %v1264, 0.5
        %v1281 = vmul.f32 %v1265, 0.5
        %v1282 = vmul.f32 %v1266, 0.5
        %v1283 = vmul.f32 %v1267, 0.5
        %v1284 = vmul.f32 %v1268, 0.5
        %v1285 = vmul.f32 %v1269, 0.5
        %v1286 = vmul.f32 %v1270, 0.5
        %v1287 = vadd.f32 %v1271, 0.5
        %v1288 = vadd.f32 %v1272, 0.5
        %v1289 = vadd.f32 %v1273, 0.5
        %v1290 = vadd.f32 %v1274, 0.5
        %v1291 = vadd.f32 %v1275, 0.5
        %v1292 = vadd.f32 %v1276, 0.5
        %v1293 = vadd.f32 %v1277, 0.5
        %v1294 = vadd.f32 %v1278, 0.5
        %v1295 = vadd.f32 %v1279, 0.5
        %v1296 = vadd.f32 %v1280, 0.5
        %v1297 = vadd.f32 %v1281, 0.5
        %v1298 = vadd.f32 %v1282, 0.5
        %v1299 = vadd.f32 %v1283, 0.5
        %v1300 = vadd.f32 %v1284, 0.5
        %v1301 = vadd.f32 %v1285, 0.5
        %v1302 = vadd.f32 %v1286, 0.5
        %v1303 = vmul.f32 %v1223, %v1287
        %v1304 = vmul.f32 %v1224, %v1288
        %v1305 = vmul.f32 %v1225, %v1289
        %v1306 = vmul.f32 %v1226, %v1290
        %v1307 = vmul.f32 %v1227, %v1291
        %v1308 = vmul.f32 %v1228, %v1292
        %v1309 = vmul.f32 %v1229, %v1293
        %v1310 = vmul.f32 %v1230, %v1294
        %v1311 = vmul.f32 %v1231, %v1295
        %v1312 = vmul.f32 %v1232, %v1296
        %v1313 = vmul.f32 %v1233, %v1297
        %v1314 = vmul.f32 %v1234, %v1298
        %v1315 = vmul.f32 %v1235, %v1299
        %v1316 = vmul.f32 %v1236, %v1300
        %v1317 = vmul.f32 %v1237, %v1301
        %v1318 = vmul.f32 %v1238, %v1302
        %v1319 = vstv %s1220
        %v1320 = vmul.f32 %v1319, %v1303
        %v1321 = vmul.f32 %v1319, %v1304
        %v1322 = vmul.f32 %v1319, %v1305
        %v1323 = vmul.f32 %v1319, %v1306
        %v1324 = vmul.f32 %v1319, %v1307
        %v1325 = vmul.f32 %v1319, %v1308
        %v1326 = vmul.f32 %v1319, %v1309
        %v1327 = vmul.f32 %v1319, %v1310
        %v1328 = vmul.f32 %v1319, %v1311
        %v1329 = vmul.f32 %v1319, %v1312
        %v1330 = vmul.f32 %v1319, %v1313
        %v1331 = vmul.f32 %v1319, %v1314
        %v1332 = vmul.f32 %v1319, %v1315
        %v1333 = vmul.f32 %v1319, %v1316
        %v1334 = vmul.f32 %v1319, %v1317
        %v1335 = vmul.f32 %v1319, %v1318
        %v1336 = vadd.f32 %v1204, %v1320
        %v1337 = vadd.f32 %v1205, %v1321
        %v1338 = vadd.f32 %v1206, %v1322
        %v1339 = vadd.f32 %v1207, %v1323
        %v1340 = vadd.f32 %v1208, %v1324
        %v1341 = vadd.f32 %v1209, %v1325
        %v1342 = vadd.f32 %v1210, %v1326
        %v1343 = vadd.f32 %v1211, %v1327
        %v1344 = vadd.f32 %v1212, %v1328
        %v1345 = vadd.f32 %v1213, %v1329
        %v1346 = vadd.f32 %v1214, %v1330
        %v1347 = vadd.f32 %v1215, %v1331
        %v1348 = vadd.f32 %v1216, %v1332
        %v1349 = vadd.f32 %v1217, %v1333
        %v1350 = vadd.f32 %v1218, %v1334
        %v1351 = vadd.f32 %v1219, %v1335
        %s1352 = sld [smem:[#allocation5 + $0x5]]
        %s1353 = sld [smem:[#allocation3 + $0x5]]
        %v1354 = vstv %s1353
        %v1355 = vmul.f32 %v614, %v1354
        %v1356 = vmul.f32 %v620, %v1354
        %v1357 = vmul.f32 %v626, %v1354
        %v1358 = vmul.f32 %v632, %v1354
        %v1359 = vmul.f32 %v638, %v1354
        %v1360 = vmul.f32 %v644, %v1354
        %v1361 = vmul.f32 %v650, %v1354
        %v1362 = vmul.f32 %v656, %v1354
        %v1363 = vmul.f32 %v662, %v1354
        %v1364 = vmul.f32 %v668, %v1354
        %v1365 = vmul.f32 %v674, %v1354
        %v1366 = vmul.f32 %v680, %v1354
        %v1367 = vmul.f32 %v686, %v1354
        %v1368 = vmul.f32 %v692, %v1354
        %v1369 = vmul.f32 %v698, %v1354
        %v1370 = vmul.f32 %v704, %v1354
        %v1371 = vmul.f32 %v1355, 0.5
        %v1372 = vmul.f32 %v1356, 0.5
        %v1373 = vmul.f32 %v1357, 0.5
        %v1374 = vmul.f32 %v1358, 0.5
        %v1375 = vmul.f32 %v1359, 0.5
        %v1376 = vmul.f32 %v1360, 0.5
        %v1377 = vmul.f32 %v1361, 0.5
        %v1378 = vmul.f32 %v1362, 0.5
        %v1379 = vmul.f32 %v1363, 0.5
        %v1380 = vmul.f32 %v1364, 0.5
        %v1381 = vmul.f32 %v1365, 0.5
        %v1382 = vmul.f32 %v1366, 0.5
        %v1383 = vmul.f32 %v1367, 0.5
        %v1384 = vmul.f32 %v1368, 0.5
        %v1385 = vmul.f32 %v1369, 0.5
        %v1386 = vmul.f32 %v1370, 0.5
        %v1387 = vtanh.pop %v1371
        %v1388 = vtanh.pop %v1372
        %v1389 = vtanh.pop %v1373
        %v1390 = vtanh.pop %v1374
        %v1391 = vtanh.pop %v1375
        %v1392 = vtanh.pop %v1376
        %v1393 = vtanh.pop %v1377
        %v1394 = vtanh.pop %v1378
        %v1395 = vtanh.pop %v1379
        %v1396 = vtanh.pop %v1380
        %v1397 = vtanh.pop %v1381
        %v1398 = vtanh.pop %v1382
        %v1399 = vtanh.pop %v1383
        %v1400 = vtanh.pop %v1384
        %v1401 = vtanh.pop %v1385
        %v1402 = vtanh.pop %v1386
        %v1403 = vmul.f32 %v1387, 0.5
        %v1404 = vmul.f32 %v1388, 0.5
        %v1405 = vmul.f32 %v1389, 0.5
        %v1406 = vmul.f32 %v1390, 0.5
        %v1407 = vmul.f32 %v1391, 0.5
        %v1408 = vmul.f32 %v1392, 0.5
        %v1409 = vmul.f32 %v1393, 0.5
        %v1410 = vmul.f32 %v1394, 0.5
        %v1411 = vmul.f32 %v1395, 0.5
        %v1412 = vmul.f32 %v1396, 0.5
        %v1413 = vmul.f32 %v1397, 0.5
        %v1414 = vmul.f32 %v1398, 0.5
        %v1415 = vmul.f32 %v1399, 0.5
        %v1416 = vmul.f32 %v1400, 0.5
        %v1417 = vmul.f32 %v1401, 0.5
        %v1418 = vmul.f32 %v1402, 0.5
        %v1419 = vadd.f32 %v1403, 0.5
        %v1420 = vadd.f32 %v1404, 0.5
        %v1421 = vadd.f32 %v1405, 0.5
        %v1422 = vadd.f32 %v1406, 0.5
        %v1423 = vadd.f32 %v1407, 0.5
        %v1424 = vadd.f32 %v1408, 0.5
        %v1425 = vadd.f32 %v1409, 0.5
        %v1426 = vadd.f32 %v1410, 0.5
        %v1427 = vadd.f32 %v1411, 0.5
        %v1428 = vadd.f32 %v1412, 0.5
        %v1429 = vadd.f32 %v1413, 0.5
        %v1430 = vadd.f32 %v1414, 0.5
        %v1431 = vadd.f32 %v1415, 0.5
        %v1432 = vadd.f32 %v1416, 0.5
        %v1433 = vadd.f32 %v1417, 0.5
        %v1434 = vadd.f32 %v1418, 0.5
        %v1435 = vmul.f32 %v1355, %v1419
        %v1436 = vmul.f32 %v1356, %v1420
        %v1437 = vmul.f32 %v1357, %v1421
        %v1438 = vmul.f32 %v1358, %v1422
        %v1439 = vmul.f32 %v1359, %v1423
        %v1440 = vmul.f32 %v1360, %v1424
        %v1441 = vmul.f32 %v1361, %v1425
        %v1442 = vmul.f32 %v1362, %v1426
        %v1443 = vmul.f32 %v1363, %v1427
        %v1444 = vmul.f32 %v1364, %v1428
        %v1445 = vmul.f32 %v1365, %v1429
        %v1446 = vmul.f32 %v1366, %v1430
        %v1447 = vmul.f32 %v1367, %v1431
        %v1448 = vmul.f32 %v1368, %v1432
        %v1449 = vmul.f32 %v1369, %v1433
        %v1450 = vmul.f32 %v1370, %v1434
        %v1451 = vstv %s1352
        %v1452 = vmul.f32 %v1451, %v1435
        %v1453 = vmul.f32 %v1451, %v1436
        %v1454 = vmul.f32 %v1451, %v1437
        %v1455 = vmul.f32 %v1451, %v1438
        %v1456 = vmul.f32 %v1451, %v1439
        %v1457 = vmul.f32 %v1451, %v1440
        %v1458 = vmul.f32 %v1451, %v1441
        %v1459 = vmul.f32 %v1451, %v1442
        %v1460 = vmul.f32 %v1451, %v1443
        %v1461 = vmul.f32 %v1451, %v1444
        %v1462 = vmul.f32 %v1451, %v1445
        %v1463 = vmul.f32 %v1451, %v1446
        %v1464 = vmul.f32 %v1451, %v1447
        %v1465 = vmul.f32 %v1451, %v1448
        %v1466 = vmul.f32 %v1451, %v1449
        %v1467 = vmul.f32 %v1451, %v1450
        %v1468 = vadd.f32 %v1336, %v1452
        %v1469 = vadd.f32 %v1337, %v1453
        %v1470 = vadd.f32 %v1338, %v1454
        %v1471 = vadd.f32 %v1339, %v1455
        %v1472 = vadd.f32 %v1340, %v1456
        %v1473 = vadd.f32 %v1341, %v1457
        %v1474 = vadd.f32 %v1342, %v1458
        %v1475 = vadd.f32 %v1343, %v1459
        %v1476 = vadd.f32 %v1344, %v1460
        %v1477 = vadd.f32 %v1345, %v1461
        %v1478 = vadd.f32 %v1346, %v1462
        %v1479 = vadd.f32 %v1347, %v1463
        %v1480 = vadd.f32 %v1348, %v1464
        %v1481 = vadd.f32 %v1349, %v1465
        %v1482 = vadd.f32 %v1350, %v1466
        %v1483 = vadd.f32 %v1351, %v1467
        %v1484 = vmul.f32 %v1468, 0.5
        %v1485 = vmul.f32 %v1469, 0.5
        %v1486 = vmul.f32 %v1470, 0.5
        %v1487 = vmul.f32 %v1471, 0.5
        %v1488 = vmul.f32 %v1472, 0.5
        %v1489 = vmul.f32 %v1473, 0.5
        %v1490 = vmul.f32 %v1474, 0.5
        %v1491 = vmul.f32 %v1475, 0.5
        %v1492 = vmul.f32 %v1476, 0.5
        %v1493 = vmul.f32 %v1477, 0.5
        %v1494 = vmul.f32 %v1478, 0.5
        %v1495 = vmul.f32 %v1479, 0.5
        %v1496 = vmul.f32 %v1480, 0.5
        %v1497 = vmul.f32 %v1481, 0.5
        %v1498 = vmul.f32 %v1482, 0.5
        %v1499 = vmul.f32 %v1483, 0.5
        %v1500 = vtanh.pop %v1484
        %v1501 = vtanh.pop %v1485
        %v1502 = vtanh.pop %v1486
        %v1503 = vtanh.pop %v1487
        %v1504 = vtanh.pop %v1488
        %v1505 = vtanh.pop %v1489
        %v1506 = vtanh.pop %v1490
        %v1507 = vtanh.pop %v1491
        %v1508 = vtanh.pop %v1492
        %v1509 = vtanh.pop %v1493
        %v1510 = vtanh.pop %v1494
        %v1511 = vtanh.pop %v1495
        %v1512 = vtanh.pop %v1496
        %v1513 = vtanh.pop %v1497
        %v1514 = vtanh.pop %v1498
        %v1515 = vtanh.pop %v1499
        %v1516 = vmul.f32 %v1500, 0.5
        %v1517 = vmul.f32 %v1501, 0.5
        %v1518 = vmul.f32 %v1502, 0.5
        %v1519 = vmul.f32 %v1503, 0.5
        %v1520 = vmul.f32 %v1504, 0.5
        %v1521 = vmul.f32 %v1505, 0.5
        %v1522 = vmul.f32 %v1506, 0.5
        %v1523 = vmul.f32 %v1507, 0.5
        %v1524 = vmul.f32 %v1508, 0.5
        %v1525 = vmul.f32 %v1509, 0.5
        %v1526 = vmul.f32 %v1510, 0.5
        %v1527 = vmul.f32 %v1511, 0.5
        %v1528 = vmul.f32 %v1512, 0.5
        %v1529 = vmul.f32 %v1513, 0.5
        %v1530 = vmul.f32 %v1514, 0.5
        %v1531 = vmul.f32 %v1515, 0.5
        %v1532 = vadd.f32 %v1516, 0.5
        %v1533 = vadd.f32 %v1517, 0.5
        %v1534 = vadd.f32 %v1518, 0.5
        %v1535 = vadd.f32 %v1519, 0.5
        %v1536 = vadd.f32 %v1520, 0.5
        %v1537 = vadd.f32 %v1521, 0.5
        %v1538 = vadd.f32 %v1522, 0.5
        %v1539 = vadd.f32 %v1523, 0.5
        %v1540 = vadd.f32 %v1524, 0.5
        %v1541 = vadd.f32 %v1525, 0.5
        %v1542 = vadd.f32 %v1526, 0.5
        %v1543 = vadd.f32 %v1527, 0.5
        %v1544 = vadd.f32 %v1528, 0.5
        %v1545 = vadd.f32 %v1529, 0.5
        %v1546 = vadd.f32 %v1530, 0.5
        %v1547 = vadd.f32 %v1531, 0.5
        %v1548 = vmul.f32 %v1468, %v1532
        %v1549 = vmul.f32 %v1469, %v1533
        %v1550 = vmul.f32 %v1470, %v1534
        %v1551 = vmul.f32 %v1471, %v1535
        %v1552 = vmul.f32 %v1472, %v1536
        %v1553 = vmul.f32 %v1473, %v1537
        %v1554 = vmul.f32 %v1474, %v1538
        %v1555 = vmul.f32 %v1475, %v1539
        %v1556 = vmul.f32 %v1476, %v1540
        %v1557 = vmul.f32 %v1477, %v1541
        %v1558 = vmul.f32 %v1478, %v1542
        %v1559 = vmul.f32 %v1479, %v1543
        %v1560 = vmul.f32 %v1480, %v1544
        %v1561 = vmul.f32 %v1481, %v1545
        %v1562 = vmul.f32 %v1482, %v1546
        %v1563 = vmul.f32 %v1483, %v1547
        %v1564 = vld [vmem:[%s7] sm:$0xff]
        %v1565 = vld [vmem:[%s7 + $0x8] sm:$0xff]
        %v1566 = vld [vmem:[%s7 + $0x10] sm:$0xff]
        %v1567 = vld [vmem:[%s7 + $0x18] sm:$0xff]
        %v1568 = vld [vmem:[%s7 + $0x20] sm:$0xff]
        %v1569 = vld [vmem:[%s7 + $0x28] sm:$0xff]
        %v1570 = vld [vmem:[%s7 + $0x30] sm:$0xff]
        %v1571 = vld [vmem:[%s7 + $0x38] sm:$0xff]
        %v1572 = vld [vmem:[%s7 + $0x40] sm:$0xff]
        %v1573 = vld [vmem:[%s7 + $0x48] sm:$0xff]
        %v1574 = vld [vmem:[%s7 + $0x50] sm:$0xff]
        %v1575 = vld [vmem:[%s7 + $0x58] sm:$0xff]
        %v1576 = vld [vmem:[%s7 + $0x60] sm:$0xff]
        %v1577 = vld [vmem:[%s7 + $0x68] sm:$0xff]
        %v1578 = vld [vmem:[%s7 + $0x70] sm:$0xff]
        %v1579 = vld [vmem:[%s7 + $0x78] sm:$0xff]
        %1580 = vmatprep.subr.mxu0 0.0
        %1581 = vmatpush1.msra.mxu0 %v1579
        %1582 = vmatprep.subr.mxu0 0.0
        %1583 = vmatpush1.msra.mxu0 %v1578
        %1584 = vmatprep.subr.mxu0 0.0
        %1585 = vmatpush1.msra.mxu0 %v1577
        %1586 = vmatprep.subr.mxu0 0.0
        %1587 = vmatpush1.msra.mxu0 %v1576
        %1588 = vmatprep.subr.mxu0 0.0
        %1589 = vmatpush1.msra.mxu0 %v1575
        %1590 = vmatprep.subr.mxu0 0.0
        %1591 = vmatpush1.msra.mxu0 %v1574
        %1592 = vmatprep.subr.mxu0 0.0
        %1593 = vmatpush1.msra.mxu0 %v1573
        %1594 = vmatprep.subr.mxu0 0.0
        %1595 = vmatpush1.msra.mxu0 %v1572
        %1596 = vmatprep.subr.mxu0 0.0
        %1597 = vmatpush1.msra.mxu0 %v1571
        %1598 = vmatprep.subr.mxu0 0.0
        %1599 = vmatpush1.msra.mxu0 %v1570
        %1600 = vmatprep.subr.mxu0 0.0
        %1601 = vmatpush1.msra.mxu0 %v1569
        %1602 = vmatprep.subr.mxu0 0.0
        %1603 = vmatpush1.msra.mxu0 %v1568
        %1604 = vmatprep.subr.mxu0 0.0
        %1605 = vmatpush1.msra.mxu0 %v1567
        %1606 = vmatprep.subr.mxu0 0.0
        %1607 = vmatpush1.msra.mxu0 %v1566
        %1608 = vmatprep.subr.mxu0 0.0
        %1609 = vmatpush1.msra.mxu0 %v1565
        %1610 = vmatprep.subr.mxu0 0.0
        %1611 = vmatpush1.msra.mxu0 %v1564
        %1612 = vmatprep.subr.mxu0 0.0
        %1613 = vmatpush2.msra.mxu0 0.0
        %1614 = vmatprep.subr.mxu0 0.0
        %1615 = vmatpush2.msra.mxu0 0.0
        %1616 = vmatprep.subr.mxu0 0.0
        %1617 = vmatpush2.msra.mxu0 0.0
        %1618 = vmatprep.subr.mxu0 0.0
        %1619 = vmatpush2.msra.mxu0 0.0
        %1620 = vmatprep.subr.mxu0 0.0
        %1621 = vmatpush2.msra.mxu0 0.0
        %1622 = vmatprep.subr.mxu0 0.0
        %1623 = vmatpush2.msra.mxu0 0.0
        %1624 = vmatprep.subr.mxu0 0.0
        %1625 = vmatpush2.msra.mxu0 0.0
        %1626 = vmatprep.subr.mxu0 0.0
        %1627 = vmatpush2.msra.mxu0 0.0
        %1628 = vmatprep.subr.mxu0 0.0
        %1629 = vmatpush2.msra.mxu0 0.0
        %1630 = vmatprep.subr.mxu0 0.0
        %1631 = vmatpush2.msra.mxu0 0.0
        %1632 = vmatprep.subr.mxu0 0.0
        %1633 = vmatpush2.msra.mxu0 0.0
        %1634 = vmatprep.subr.mxu0 0.0
        %1635 = vmatpush2.msra.mxu0 0.0
        %1636 = vmatprep.subr.mxu0 0.0
        %1637 = vmatpush2.msra.mxu0 0.0
        %1638 = vmatprep.subr.mxu0 0.0
        %1639 = vmatpush2.msra.mxu0 0.0
        %1640 = vmatprep.subr.mxu0 0.0
        %1641 = vmatpush2.msra.mxu0 0.0
        %1642 = vmatprep.subr.mxu0 0.0
        %1643 = vmatpush2.msra.mxu0 0.0
        %1644 = vmatprep.mubr.f32.mxu0 0.0
        %1645 = vmatmul.mubr.f32.gmra.mxu0 %v1548
        %v1646 = vpop.f32.mrf.mxu0
        %v1647 = vadd.f32 0.0, %v1646
        %v1648 = vpop.f32.mrf.mxu0
        %1649 = vmatprep.mubr.f32.mxu0 0.0
        %1650 = vmatmul.mubr.f32.gmra.mxu0 %v1549
        %v1651 = vpop.f32.mrf.mxu0
        %v1652 = vadd.f32 0.0, %v1651
        %v1653 = vpop.f32.mrf.mxu0
        %1654 = vmatprep.mubr.f32.mxu0 0.0
        %1655 = vmatmul.mubr.f32.gmra.mxu0 %v1550
        %v1656 = vpop.f32.mrf.mxu0
        %v1657 = vadd.f32 0.0, %v1656
        %v1658 = vpop.f32.mrf.mxu0
        %1659 = vmatprep.mubr.f32.mxu0 0.0
        %1660 = vmatmul.mubr.f32.gmra.mxu0 %v1551
        %v1661 = vpop.f32.mrf.mxu0
        %v1662 = vadd.f32 0.0, %v1661
        %v1663 = vpop.f32.mrf.mxu0
        %1664 = vmatprep.mubr.f32.mxu0 0.0
        %1665 = vmatmul.mubr.f32.gmra.mxu0 %v1552
        %v1666 = vpop.f32.mrf.mxu0
        %v1667 = vadd.f32 0.0, %v1666
        %v1668 = vpop.f32.mrf.mxu0
        %1669 = vmatprep.mubr.f32.mxu0 0.0
        %1670 = vmatmul.mubr.f32.gmra.mxu0 %v1553
        %v1671 = vpop.f32.mrf.mxu0
        %v1672 = vadd.f32 0.0, %v1671
        %v1673 = vpop.f32.mrf.mxu0
        %1674 = vmatprep.mubr.f32.mxu0 0.0
        %1675 = vmatmul.mubr.f32.gmra.mxu0 %v1554
        %v1676 = vpop.f32.mrf.mxu0
        %v1677 = vadd.f32 0.0, %v1676
        %v1678 = vpop.f32.mrf.mxu0
        %1679 = vmatprep.mubr.f32.mxu0 0.0
        %1680 = vmatmul.mubr.f32.gmra.mxu0 %v1555
        %v1681 = vpop.f32.mrf.mxu0
        %v1682 = vadd.f32 0.0, %v1681
        %v1683 = vpop.f32.mrf.mxu0
        %1684 = vmatprep.mubr.f32.mxu0 0.0
        %1685 = vmatmul.mubr.f32.gmra.mxu0 %v1556
        %v1686 = vpop.f32.mrf.mxu0
        %v1687 = vadd.f32 0.0, %v1686
        %v1688 = vpop.f32.mrf.mxu0
        %1689 = vmatprep.mubr.f32.mxu0 0.0
        %1690 = vmatmul.mubr.f32.gmra.mxu0 %v1557
        %v1691 = vpop.f32.mrf.mxu0
        %v1692 = vadd.f32 0.0, %v1691
        %v1693 = vpop.f32.mrf.mxu0
        %1694 = vmatprep.mubr.f32.mxu0 0.0
        %1695 = vmatmul.mubr.f32.gmra.mxu0 %v1558
        %v1696 = vpop.f32.mrf.mxu0
        %v1697 = vadd.f32 0.0, %v1696
        %v1698 = vpop.f32.mrf.mxu0
        %1699 = vmatprep.mubr.f32.mxu0 0.0
        %1700 = vmatmul.mubr.f32.gmra.mxu0 %v1559
        %v1701 = vpop.f32.mrf.mxu0
        %v1702 = vadd.f32 0.0, %v1701
        %v1703 = vpop.f32.mrf.mxu0
        %1704 = vmatprep.mubr.f32.mxu0 0.0
        %1705 = vmatmul.mubr.f32.gmra.mxu0 %v1560
        %v1706 = vpop.f32.mrf.mxu0
        %v1707 = vadd.f32 0.0, %v1706
        %v1708 = vpop.f32.mrf.mxu0
        %1709 = vmatprep.mubr.f32.mxu0 0.0
        %1710 = vmatmul.mubr.f32.gmra.mxu0 %v1561
        %v1711 = vpop.f32.mrf.mxu0
        %v1712 = vadd.f32 0.0, %v1711
        %v1713 = vpop.f32.mrf.mxu0
        %1714 = vmatprep.mubr.f32.mxu0 0.0
        %1715 = vmatmul.mubr.f32.gmra.mxu0 %v1562
        %v1716 = vpop.f32.mrf.mxu0
        %v1717 = vadd.f32 0.0, %v1716
        %v1718 = vpop.f32.mrf.mxu0
        %1719 = vmatprep.mubr.f32.mxu0 0.0
        %1720 = vmatmul.mubr.f32.gmra.mxu0 %v1563
        %v1721 = vpop.f32.mrf.mxu0
        %v1722 = vadd.f32 0.0, %v1721
        %v1723 = vpop.f32.mrf.mxu0
        %1724 = vdwg.mxu0
        %v1725 = vadd.f32 %v616, %v1647
        %v1726 = vadd.f32 %v622, %v1652
        %v1727 = vadd.f32 %v628, %v1657
        %v1728 = vadd.f32 %v634, %v1662
        %v1729 = vadd.f32 %v640, %v1667
        %v1730 = vadd.f32 %v646, %v1672
        %v1731 = vadd.f32 %v652, %v1677
        %v1732 = vadd.f32 %v658, %v1682
        %v1733 = vadd.f32 %v664, %v1687
        %v1734 = vadd.f32 %v670, %v1692
        %v1735 = vadd.f32 %v676, %v1697
        %v1736 = vadd.f32 %v682, %v1702
        %v1737 = vadd.f32 %v688, %v1707
        %v1738 = vadd.f32 %v694, %v1712
        %v1739 = vadd.f32 %v700, %v1717
        %v1740 = vadd.f32 %v706, %v1722
        %v1741 = vld [vmem:[%s457] sm:$0xff]
        %v1742 = vld [vmem:[%s457 + $0x8] sm:$0xff]
        %v1743 = vld [vmem:[%s457 + $0x10] sm:$0xff]
        %v1744 = vld [vmem:[%s457 + $0x18] sm:$0xff]
        %v1745 = vld [vmem:[%s457 + $0x20] sm:$0xff]
        %v1746 = vld [vmem:[%s457 + $0x28] sm:$0xff]
        %v1747 = vld [vmem:[%s457 + $0x30] sm:$0xff]
        %v1748 = vld [vmem:[%s457 + $0x38] sm:$0xff]
        %v1749 = vld [vmem:[%s457 + $0x40] sm:$0xff]
        %v1750 = vld [vmem:[%s457 + $0x48] sm:$0xff]
        %v1751 = vld [vmem:[%s457 + $0x50] sm:$0xff]
        %v1752 = vld [vmem:[%s457 + $0x58] sm:$0xff]
        %v1753 = vld [vmem:[%s457 + $0x60] sm:$0xff]
        %v1754 = vld [vmem:[%s457 + $0x68] sm:$0xff]
        %v1755 = vld [vmem:[%s457 + $0x70] sm:$0xff]
        %v1756 = vld [vmem:[%s457 + $0x78] sm:$0xff]
        %v1757 = vld [vmem:[%s6] sm:$0x1]
        %vm1758 = vcmp.eq.s32.totalorder %v1741, 1
        %vm1759 = vcmp.eq.s32.totalorder %v1742, 1
        %vm1760 = vcmp.eq.s32.totalorder %v1743, 1
        %vm1761 = vcmp.eq.s32.totalorder %v1744, 1
        %vm1762 = vcmp.eq.s32.totalorder %v1745, 1
        %vm1763 = vcmp.eq.s32.totalorder %v1746, 1
        %vm1764 = vcmp.eq.s32.totalorder %v1747, 1
        %vm1765 = vcmp.eq.s32.totalorder %v1748, 1
        %vm1766 = vcmp.eq.s32.totalorder %v1749, 1
        %vm1767 = vcmp.eq.s32.totalorder %v1750, 1
        %vm1768 = vcmp.eq.s32.totalorder %v1751, 1
        %vm1769 = vcmp.eq.s32.totalorder %v1752, 1
        %vm1770 = vcmp.eq.s32.totalorder %v1753, 1
        %vm1771 = vcmp.eq.s32.totalorder %v1754, 1
        %vm1772 = vcmp.eq.s32.totalorder %v1755, 1
        %vm1773 = vcmp.eq.s32.totalorder %v1756, 1
        %v1774 = vld [vmem:[%s6 + $0x1] sm:$0x1]
        %v1775 = vsel %vm1758, 1, 0
        %v1776 = vsel %vm1759, 1, 0
        %v1777 = vsel %vm1760, 1, 0
        %v1778 = vsel %vm1761, 1, 0
        %v1779 = vsel %vm1762, 1, 0
        %v1780 = vsel %vm1763, 1, 0
        %v1781 = vsel %vm1764, 1, 0
        %v1782 = vsel %vm1765, 1, 0
        %v1783 = vsel %vm1766, 1, 0
        %v1784 = vsel %vm1767, 1, 0
        %v1785 = vsel %vm1768, 1, 0
        %v1786 = vsel %vm1769, 1, 0
        %v1787 = vsel %vm1770, 1, 0
        %v1788 = vsel %vm1771, 1, 0
        %v1789 = vsel %vm1772, 1, 0
        %v1790 = vsel %vm1773, 1, 0
        %1791 = vset.pattern.permute.xlu0 0
        %1792 = vperm.xlu0 %1791, %v1775
        %v1793 = vpop.permute.xlu0 %1792
        %1794 = vset.pattern.permute.xlu0 0
        %1795 = vperm.xlu0 %1794, %v1776
        %v1796 = vpop.permute.xlu0 %1795
        %1797 = vset.pattern.permute.xlu0 0
        %1798 = vperm.xlu0 %1797, %v1777
        %v1799 = vpop.permute.xlu0 %1798
        %1800 = vset.pattern.permute.xlu0 0
        %1801 = vperm.xlu0 %1800, %v1778
        %v1802 = vpop.permute.xlu0 %1801
        %1803 = vset.pattern.permute.xlu0 0
        %1804 = vperm.xlu0 %1803, %v1779
        %v1805 = vpop.permute.xlu0 %1804
        %1806 = vset.pattern.permute.xlu0 0
        %1807 = vperm.xlu0 %1806, %v1780
        %v1808 = vpop.permute.xlu0 %1807
        %1809 = vset.pattern.permute.xlu0 0
        %1810 = vperm.xlu0 %1809, %v1781
        %v1811 = vpop.permute.xlu0 %1810
        %1812 = vset.pattern.permute.xlu0 0
        %1813 = vperm.xlu0 %1812, %v1782
        %v1814 = vpop.permute.xlu0 %1813
        %1815 = vset.pattern.permute.xlu0 0
        %1816 = vperm.xlu0 %1815, %v1783
        %v1817 = vpop.permute.xlu0 %1816
        %1818 = vset.pattern.permute.xlu0 0
        %1819 = vperm.xlu0 %1818, %v1784
        %v1820 = vpop.permute.xlu0 %1819
        %1821 = vset.pattern.permute.xlu0 0
        %1822 = vperm.xlu0 %1821, %v1785
        %v1823 = vpop.permute.xlu0 %1822
        %1824 = vset.pattern.permute.xlu0 0
        %1825 = vperm.xlu0 %1824, %v1786
        %v1826 = vpop.permute.xlu0 %1825
        %1827 = vset.pattern.permute.xlu0 0
        %1828 = vperm.xlu0 %1827, %v1787
        %v1829 = vpop.permute.xlu0 %1828
        %1830 = vset.pattern.permute.xlu0 0
        %1831 = vperm.xlu0 %1830, %v1788
        %v1832 = vpop.permute.xlu0 %1831
        %1833 = vset.pattern.permute.xlu0 0
        %1834 = vperm.xlu0 %1833, %v1789
        %v1835 = vpop.permute.xlu0 %1834
        %1836 = vset.pattern.permute.xlu0 0
        %1837 = vperm.xlu0 %1836, %v1790
        %v1838 = vpop.permute.xlu0 %1837
        %vm1839 = vcmp.eq.s32.totalorder %v1793, 1
        %vm1840 = vcmp.eq.s32.totalorder %v1796, 1
        %vm1841 = vcmp.eq.s32.totalorder %v1799, 1
        %vm1842 = vcmp.eq.s32.totalorder %v1802, 1
        %vm1843 = vcmp.eq.s32.totalorder %v1805, 1
        %vm1844 = vcmp.eq.s32.totalorder %v1808, 1
        %vm1845 = vcmp.eq.s32.totalorder %v1811, 1
        %vm1846 = vcmp.eq.s32.totalorder %v1814, 1
        %vm1847 = vcmp.eq.s32.totalorder %v1817, 1
        %vm1848 = vcmp.eq.s32.totalorder %v1820, 1
        %vm1849 = vcmp.eq.s32.totalorder %v1823, 1
        %vm1850 = vcmp.eq.s32.totalorder %v1826, 1
        %vm1851 = vcmp.eq.s32.totalorder %v1829, 1
        %vm1852 = vcmp.eq.s32.totalorder %v1832, 1
        %vm1853 = vcmp.eq.s32.totalorder %v1835, 1
        %vm1854 = vcmp.eq.s32.totalorder %v1838, 1
        %v1855 = vlaneseq
        %v1856 = vshrl.u32 %v1855, 7
        %v1857 = vsub.s32 0, %v1856
        %v1858 = vrot.slane %v1774, %v1857
        %v1859 = vlaneseq
        %v1860 = vshrl.u32 %v1859, 7
        %v1861 = vsub.s32 0, %v1860
        %v1862 = vrot.slane %v1757, %v1861
        %v1863 = vsel %vm1839, %v1858, %v1862
        %v1864 = vsel %vm1840, %v1858, %v1862
        %v1865 = vsel %vm1841, %v1858, %v1862
        %v1866 = vsel %vm1842, %v1858, %v1862
        %v1867 = vsel %vm1843, %v1858, %v1862
        %v1868 = vsel %vm1844, %v1858, %v1862
        %v1869 = vsel %vm1845, %v1858, %v1862
        %v1870 = vsel %vm1846, %v1858, %v1862
        %v1871 = vsel %vm1847, %v1858, %v1862
        %v1872 = vsel %vm1848, %v1858, %v1862
        %v1873 = vsel %vm1849, %v1858, %v1862
        %v1874 = vsel %vm1850, %v1858, %v1862
        %v1875 = vsel %vm1851, %v1858, %v1862
        %v1876 = vsel %vm1852, %v1858, %v1862
        %v1877 = vsel %vm1853, %v1858, %v1862
        %v1878 = vsel %vm1854, %v1858, %v1862
        %vm1879 = vcmp.eq.s32.totalorder %v1741, 2
        %vm1880 = vcmp.eq.s32.totalorder %v1742, 2
        %vm1881 = vcmp.eq.s32.totalorder %v1743, 2
        %vm1882 = vcmp.eq.s32.totalorder %v1744, 2
        %vm1883 = vcmp.eq.s32.totalorder %v1745, 2
        %vm1884 = vcmp.eq.s32.totalorder %v1746, 2
        %vm1885 = vcmp.eq.s32.totalorder %v1747, 2
        %vm1886 = vcmp.eq.s32.totalorder %v1748, 2
        %vm1887 = vcmp.eq.s32.totalorder %v1749, 2
        %vm1888 = vcmp.eq.s32.totalorder %v1750, 2
        %vm1889 = vcmp.eq.s32.totalorder %v1751, 2
        %vm1890 = vcmp.eq.s32.totalorder %v1752, 2
        %vm1891 = vcmp.eq.s32.totalorder %v1753, 2
        %vm1892 = vcmp.eq.s32.totalorder %v1754, 2
        %vm1893 = vcmp.eq.s32.totalorder %v1755, 2
        %vm1894 = vcmp.eq.s32.totalorder %v1756, 2
        %v1895 = vld [vmem:[%s6 + $0x2] sm:$0x1]
        %v1896 = vsel %vm1879, 1, 0
        %v1897 = vsel %vm1880, 1, 0
        %v1898 = vsel %vm1881, 1, 0
        %v1899 = vsel %vm1882, 1, 0
        %v1900 = vsel %vm1883, 1, 0
        %v1901 = vsel %vm1884, 1, 0
        %v1902 = vsel %vm1885, 1, 0
        %v1903 = vsel %vm1886, 1, 0
        %v1904 = vsel %vm1887, 1, 0
        %v1905 = vsel %vm1888, 1, 0
        %v1906 = vsel %vm1889, 1, 0
        %v1907 = vsel %vm1890, 1, 0
        %v1908 = vsel %vm1891, 1, 0
        %v1909 = vsel %vm1892, 1, 0
        %v1910 = vsel %vm1893, 1, 0
        %v1911 = vsel %vm1894, 1, 0
        %1912 = vset.pattern.permute.xlu0 0
        %1913 = vperm.xlu0 %1912, %v1896
        %v1914 = vpop.permute.xlu0 %1913
        %1915 = vset.pattern.permute.xlu0 0
        %1916 = vperm.xlu0 %1915, %v1897
        %v1917 = vpop.permute.xlu0 %1916
        %1918 = vset.pattern.permute.xlu0 0
        %1919 = vperm.xlu0 %1918, %v1898
        %v1920 = vpop.permute.xlu0 %1919
        %1921 = vset.pattern.permute.xlu0 0
        %1922 = vperm.xlu0 %1921, %v1899
        %v1923 = vpop.permute.xlu0 %1922
        %1924 = vset.pattern.permute.xlu0 0
        %1925 = vperm.xlu0 %1924, %v1900
        %v1926 = vpop.permute.xlu0 %1925
        %1927 = vset.pattern.permute.xlu0 0
        %1928 = vperm.xlu0 %1927, %v1901
        %v1929 = vpop.permute.xlu0 %1928
        %1930 = vset.pattern.permute.xlu0 0
        %1931 = vperm.xlu0 %1930, %v1902
        %v1932 = vpop.permute.xlu0 %1931
        %1933 = vset.pattern.permute.xlu0 0
        %1934 = vperm.xlu0 %1933, %v1903
        %v1935 = vpop.permute.xlu0 %1934
        %1936 = vset.pattern.permute.xlu0 0
        %1937 = vperm.xlu0 %1936, %v1904
        %v1938 = vpop.permute.xlu0 %1937
        %1939 = vset.pattern.permute.xlu0 0
        %1940 = vperm.xlu0 %1939, %v1905
        %v1941 = vpop.permute.xlu0 %1940
        %1942 = vset.pattern.permute.xlu0 0
        %1943 = vperm.xlu0 %1942, %v1906
        %v1944 = vpop.permute.xlu0 %1943
        %1945 = vset.pattern.permute.xlu0 0
        %1946 = vperm.xlu0 %1945, %v1907
        %v1947 = vpop.permute.xlu0 %1946
        %1948 = vset.pattern.permute.xlu0 0
        %1949 = vperm.xlu0 %1948, %v1908
        %v1950 = vpop.permute.xlu0 %1949
        %1951 = vset.pattern.permute.xlu0 0
        %1952 = vperm.xlu0 %1951, %v1909
        %v1953 = vpop.permute.xlu0 %1952
        %1954 = vset.pattern.permute.xlu0 0
        %1955 = vperm.xlu0 %1954, %v1910
        %v1956 = vpop.permute.xlu0 %1955
        %1957 = vset.pattern.permute.xlu0 0
        %1958 = vperm.xlu0 %1957, %v1911
        %v1959 = vpop.permute.xlu0 %1958
        %vm1960 = vcmp.eq.s32.totalorder %v1914, 1
        %vm1961 = vcmp.eq.s32.totalorder %v1917, 1
        %vm1962 = vcmp.eq.s32.totalorder %v1920, 1
        %vm1963 = vcmp.eq.s32.totalorder %v1923, 1
        %vm1964 = vcmp.eq.s32.totalorder %v1926, 1
        %vm1965 = vcmp.eq.s32.totalorder %v1929, 1
        %vm1966 = vcmp.eq.s32.totalorder %v1932, 1
        %vm1967 = vcmp.eq.s32.totalorder %v1935, 1
        %vm1968 = vcmp.eq.s32.totalorder %v1938, 1
        %vm1969 = vcmp.eq.s32.totalorder %v1941, 1
        %vm1970 = vcmp.eq.s32.totalorder %v1944, 1
        %vm1971 = vcmp.eq.s32.totalorder %v1947, 1
        %vm1972 = vcmp.eq.s32.totalorder %v1950, 1
        %vm1973 = vcmp.eq.s32.totalorder %v1953, 1
        %vm1974 = vcmp.eq.s32.totalorder %v1956, 1
        %vm1975 = vcmp.eq.s32.totalorder %v1959, 1
        %v1976 = vlaneseq
        %v1977 = vshrl.u32 %v1976, 7
        %v1978 = vsub.s32 0, %v1977
        %v1979 = vrot.slane %v1895, %v1978
        %v1980 = vsel %vm1960, %v1979, %v1863
        %v1981 = vsel %vm1961, %v1979, %v1864
        %v1982 = vsel %vm1962, %v1979, %v1865
        %v1983 = vsel %vm1963, %v1979, %v1866
        %v1984 = vsel %vm1964, %v1979, %v1867
        %v1985 = vsel %vm1965, %v1979, %v1868
        %v1986 = vsel %vm1966, %v1979, %v1869
        %v1987 = vsel %vm1967, %v1979, %v1870
        %v1988 = vsel %vm1968, %v1979, %v1871
        %v1989 = vsel %vm1969, %v1979, %v1872
        %v1990 = vsel %vm1970, %v1979, %v1873
        %v1991 = vsel %vm1971, %v1979, %v1874
        %v1992 = vsel %vm1972, %v1979, %v1875
        %v1993 = vsel %vm1973, %v1979, %v1876
        %v1994 = vsel %vm1974, %v1979, %v1877
        %v1995 = vsel %vm1975, %v1979, %v1878
        %v1996 = vadd.f32 %v1725, %v1980
        %v1997 = vadd.f32 %v1726, %v1981
        %v1998 = vadd.f32 %v1727, %v1982
        %v1999 = vadd.f32 %v1728, %v1983
        %v2000 = vadd.f32 %v1729, %v1984
        %v2001 = vadd.f32 %v1730, %v1985
        %v2002 = vadd.f32 %v1731, %v1986
        %v2003 = vadd.f32 %v1732, %v1987
        %v2004 = vadd.f32 %v1733, %v1988
        %v2005 = vadd.f32 %v1734, %v1989
        %v2006 = vadd.f32 %v1735, %v1990
        %v2007 = vadd.f32 %v1736, %v1991
        %v2008 = vadd.f32 %v1737, %v1992
        %v2009 = vadd.f32 %v1738, %v1993
        %v2010 = vadd.f32 %v1739, %v1994
        %v2011 = vadd.f32 %v1740, %v1995
        %v2012 = vmax.f32 %v1996, 0.0
        %v2013 = vmax.f32 %v1997, 0.0
        %v2014 = vmax.f32 %v1998, 0.0
        %v2015 = vmax.f32 %v1999, 0.0
        %v2016 = vmax.f32 %v2000, 0.0
        %v2017 = vmax.f32 %v2001, 0.0
        %v2018 = vmax.f32 %v2002, 0.0
        %v2019 = vmax.f32 %v2003, 0.0
        %v2020 = vmax.f32 %v2004, 0.0
        %v2021 = vmax.f32 %v2005, 0.0
        %v2022 = vmax.f32 %v2006, 0.0
        %v2023 = vmax.f32 %v2007, 0.0
        %v2024 = vmax.f32 %v2008, 0.0
        %v2025 = vmax.f32 %v2009, 0.0
        %v2026 = vmax.f32 %v2010, 0.0
        %v2027 = vmax.f32 %v2011, 0.0
        %v2028 = vld [vmem:[%s8] sm:$0xff]
        %v2029 = vld [vmem:[%s8 + $0x8] sm:$0xff]
        %v2030 = vld [vmem:[%s8 + $0x10] sm:$0xff]
        %v2031 = vld [vmem:[%s8 + $0x18] sm:$0xff]
        %v2032 = vld [vmem:[%s8 + $0x20] sm:$0xff]
        %v2033 = vld [vmem:[%s8 + $0x28] sm:$0xff]
        %v2034 = vld [vmem:[%s8 + $0x30] sm:$0xff]
        %v2035 = vld [vmem:[%s8 + $0x38] sm:$0xff]
        %v2036 = vld [vmem:[%s8 + $0x40] sm:$0xff]
        %v2037 = vld [vmem:[%s8 + $0x48] sm:$0xff]
        %v2038 = vld [vmem:[%s8 + $0x50] sm:$0xff]
        %v2039 = vld [vmem:[%s8 + $0x58] sm:$0xff]
        %v2040 = vld [vmem:[%s8 + $0x60] sm:$0xff]
        %v2041 = vld [vmem:[%s8 + $0x68] sm:$0xff]
        %v2042 = vld [vmem:[%s8 + $0x70] sm:$0xff]
        %v2043 = vld [vmem:[%s8 + $0x78] sm:$0xff]
        %v2044 = vld [vmem:[%s9] sm:$0x1]
        %v2046 = vlaneseq
        %v2047 = vshrl.u32 %v2046, 7
        %v2048 = vsub.s32 0, %v2047
        %v2049 = vrot.slane %v2044, %v2048
        %2051 = vmatprep.subr.mxu0 0.0
        %2052 = vmatpush1.msra.mxu0 %v2043
        %2053 = vmatprep.subr.mxu0 0.0
        %2054 = vmatpush1.msra.mxu0 %v2042
        %2055 = vmatprep.subr.mxu0 0.0
        %2056 = vmatpush1.msra.mxu0 %v2041
        %2057 = vmatprep.subr.mxu0 0.0
        %2058 = vmatpush1.msra.mxu0 %v2040
        %2059 = vmatprep.subr.mxu0 0.0
        %2060 = vmatpush1.msra.mxu0 %v2039
        %2061 = vmatprep.subr.mxu0 0.0
        %2062 = vmatpush1.msra.mxu0 %v2038
        %2063 = vmatprep.subr.mxu0 0.0
        %2064 = vmatpush1.msra.mxu0 %v2037
        %2065 = vmatprep.subr.mxu0 0.0
        %2066 = vmatpush1.msra.mxu0 %v2036
        %2067 = vmatprep.subr.mxu0 0.0
        %2068 = vmatpush1.msra.mxu0 %v2035
        %2069 = vmatprep.subr.mxu0 0.0
        %2070 = vmatpush1.msra.mxu0 %v2034
        %2071 = vmatprep.subr.mxu0 0.0
        %2072 = vmatpush1.msra.mxu0 %v2033
        %2073 = vmatprep.subr.mxu0 0.0
        %2074 = vmatpush1.msra.mxu0 %v2032
        %2075 = vmatprep.subr.mxu0 0.0
        %2076 = vmatpush1.msra.mxu0 %v2031
        %2077 = vmatprep.subr.mxu0 0.0
        %2078 = vmatpush1.msra.mxu0 %v2030
        %2079 = vmatprep.subr.mxu0 0.0
        %2080 = vmatpush1.msra.mxu0 %v2029
        %2081 = vmatprep.subr.mxu0 0.0
        %2082 = vmatpush1.msra.mxu0 %v2028
        %2083 = vmatprep.subr.mxu0 0.0
        %2084 = vmatpush2.msra.mxu0 0.0
        %2085 = vmatprep.subr.mxu0 0.0
        %2086 = vmatpush2.msra.mxu0 0.0
        %2087 = vmatprep.subr.mxu0 0.0
        %2088 = vmatpush2.msra.mxu0 0.0
        %2089 = vmatprep.subr.mxu0 0.0
        %2090 = vmatpush2.msra.mxu0 0.0
        %2091 = vmatprep.subr.mxu0 0.0
        %2092 = vmatpush2.msra.mxu0 0.0
        %2093 = vmatprep.subr.mxu0 0.0
        %2094 = vmatpush2.msra.mxu0 0.0
        %2095 = vmatprep.subr.mxu0 0.0
        %2096 = vmatpush2.msra.mxu0 0.0
        %2097 = vmatprep.subr.mxu0 0.0
        %2098 = vmatpush2.msra.mxu0 0.0
        %2099 = vmatprep.subr.mxu0 0.0
        %2100 = vmatpush2.msra.mxu0 0.0
        %2101 = vmatprep.subr.mxu0 0.0
        %2102 = vmatpush2.msra.mxu0 0.0
        %2103 = vmatprep.subr.mxu0 0.0
        %2104 = vmatpush2.msra.mxu0 0.0
        %2105 = vmatprep.subr.mxu0 0.0
        %2106 = vmatpush2.msra.mxu0 0.0
        %2107 = vmatprep.subr.mxu0 0.0
        %2108 = vmatpush2.msra.mxu0 0.0
        %2109 = vmatprep.subr.mxu0 0.0
        %2110 = vmatpush2.msra.mxu0 0.0
        %2111 = vmatprep.subr.mxu0 0.0
        %2112 = vmatpush2.msra.mxu0 0.0
        %2113 = vmatprep.subr.mxu0 0.0
        %2114 = vmatpush2.msra.mxu0 0.0
        %2115 = vmatprep.mubr.f32.mxu0 0.0
        %2116 = vmatmul.mubr.f32.gmra.mxu0 %v2012
        %v2117 = vpop.f32.mrf.mxu0
        %v2118 = vadd.f32 %v2049, %v2117
        %v2119 = vpop.f32.mrf.mxu0
        %2120 = vmatprep.mubr.f32.mxu0 0.0
        %2121 = vmatmul.mubr.f32.gmra.mxu0 %v2013
        %v2122 = vpop.f32.mrf.mxu0
        %v2123 = vadd.f32 %v2049, %v2122
        %v2124 = vpop.f32.mrf.mxu0
        %2125 = vmatprep.mubr.f32.mxu0 0.0
        %2126 = vmatmul.mubr.f32.gmra.mxu0 %v2014
        %v2127 = vpop.f32.mrf.mxu0
        %v2128 = vadd.f32 %v2049, %v2127
        %v2129 = vpop.f32.mrf.mxu0
        %2130 = vmatprep.mubr.f32.mxu0 0.0
        %2131 = vmatmul.mubr.f32.gmra.mxu0 %v2015
        %v2132 = vpop.f32.mrf.mxu0
        %v2133 = vadd.f32 %v2049, %v2132
        %v2134 = vpop.f32.mrf.mxu0
        %2135 = vmatprep.mubr.f32.mxu0 0.0
        %2136 = vmatmul.mubr.f32.gmra.mxu0 %v2016
        %v2137 = vpop.f32.mrf.mxu0
        %v2138 = vadd.f32 %v2049, %v2137
        %v2139 = vpop.f32.mrf.mxu0
        %2140 = vmatprep.mubr.f32.mxu0 0.0
        %2141 = vmatmul.mubr.f32.gmra.mxu0 %v2017
        %v2142 = vpop.f32.mrf.mxu0
        %v2143 = vadd.f32 %v2049, %v2142
        %v2144 = vpop.f32.mrf.mxu0
        %2145 = vmatprep.mubr.f32.mxu0 0.0
        %2146 = vmatmul.mubr.f32.gmra.mxu0 %v2018
        %v2147 = vpop.f32.mrf.mxu0
        %v2148 = vadd.f32 %v2049, %v2147
        %v2149 = vpop.f32.mrf.mxu0
        %2150 = vmatprep.mubr.f32.mxu0 0.0
        %2151 = vmatmul.mubr.f32.gmra.mxu0 %v2019
        %v2152 = vpop.f32.mrf.mxu0
        %v2153 = vadd.f32 %v2049, %v2152
        %v2154 = vpop.f32.mrf.mxu0
        %2155 = vmatprep.mubr.f32.mxu0 0.0
        %2156 = vmatmul.mubr.f32.gmra.mxu0 %v2020
        %v2157 = vpop.f32.mrf.mxu0
        %v2158 = vadd.f32 %v2049, %v2157
        %v2159 = vpop.f32.mrf.mxu0
        %2160 = vmatprep.mubr.f32.mxu0 0.0
        %2161 = vmatmul.mubr.f32.gmra.mxu0 %v2021
        %v2162 = vpop.f32.mrf.mxu0
        %v2163 = vadd.f32 %v2049, %v2162
        %v2164 = vpop.f32.mrf.mxu0
        %2165 = vmatprep.mubr.f32.mxu0 0.0
        %2166 = vmatmul.mubr.f32.gmra.mxu0 %v2022
        %v2167 = vpop.f32.mrf.mxu0
        %v2168 = vadd.f32 %v2049, %v2167
        %v2169 = vpop.f32.mrf.mxu0
        %2170 = vmatprep.mubr.f32.mxu0 0.0
        %2171 = vmatmul.mubr.f32.gmra.mxu0 %v2023
        %v2172 = vpop.f32.mrf.mxu0
        %v2173 = vadd.f32 %v2049, %v2172
        %v2174 = vpop.f32.mrf.mxu0
        %2175 = vmatprep.mubr.f32.mxu0 0.0
        %2176 = vmatmul.mubr.f32.gmra.mxu0 %v2024
        %v2177 = vpop.f32.mrf.mxu0
        %v2178 = vadd.f32 %v2049, %v2177
        %v2179 = vpop.f32.mrf.mxu0
        %2180 = vmatprep.mubr.f32.mxu0 0.0
        %2181 = vmatmul.mubr.f32.gmra.mxu0 %v2025
        %v2182 = vpop.f32.mrf.mxu0
        %v2183 = vadd.f32 %v2049, %v2182
        %v2184 = vpop.f32.mrf.mxu0
        %2185 = vmatprep.mubr.f32.mxu0 0.0
        %2186 = vmatmul.mubr.f32.gmra.mxu0 %v2026
        %v2187 = vpop.f32.mrf.mxu0
        %v2188 = vadd.f32 %v2049, %v2187
        %v2189 = vpop.f32.mrf.mxu0
        %2190 = vmatprep.mubr.f32.mxu0 0.0
        %2191 = vmatmul.mubr.f32.gmra.mxu0 %v2027
        %v2192 = vpop.f32.mrf.mxu0
        %v2193 = vadd.f32 %v2049, %v2192
        %v2194 = vpop.f32.mrf.mxu0
        %2195 = vdwg.mxu0
        %v2196 = vmax.f32 %v2118, 0.0
        %v2197 = vmax.f32 %v2123, 0.0
        %v2198 = vmax.f32 %v2128, 0.0
        %v2199 = vmax.f32 %v2133, 0.0
        %v2200 = vmax.f32 %v2138, 0.0
        %v2201 = vmax.f32 %v2143, 0.0
        %v2202 = vmax.f32 %v2148, 0.0
        %v2203 = vmax.f32 %v2153, 0.0
        %v2204 = vmax.f32 %v2158, 0.0
        %v2205 = vmax.f32 %v2163, 0.0
        %v2206 = vmax.f32 %v2168, 0.0
        %v2207 = vmax.f32 %v2173, 0.0
        %v2208 = vmax.f32 %v2178, 0.0
        %v2209 = vmax.f32 %v2183, 0.0
        %v2210 = vmax.f32 %v2188, 0.0
        %v2211 = vmax.f32 %v2193, 0.0
        %v2212 = vld [vmem:[%s10] sm:$0x1]
        %s2213 = sld [smem:[#allocation2]]
        %v2214 = vstv %s2213
        %2215 = vmatprep.subr.mxu0 0.0
        %2216 = vmatpush1.xpose.msra.mxu0 %v2211
        %2217 = vmatprep.subr.mxu0 0.0
        %2218 = vmatpush1.xpose.msra.mxu0 %v2210
        %2219 = vmatprep.subr.mxu0 0.0
        %2220 = vmatpush1.xpose.msra.mxu0 %v2209
        %2221 = vmatprep.subr.mxu0 0.0
        %2222 = vmatpush1.xpose.msra.mxu0 %v2208
        %2223 = vmatprep.subr.mxu0 0.0
        %2224 = vmatpush1.xpose.msra.mxu0 %v2207
        %2225 = vmatprep.subr.mxu0 0.0
        %2226 = vmatpush1.xpose.msra.mxu0 %v2206
        %2227 = vmatprep.subr.mxu0 0.0
        %2228 = vmatpush1.xpose.msra.mxu0 %v2205
        %2229 = vmatprep.subr.mxu0 0.0
        %2230 = vmatpush1.xpose.msra.mxu0 %v2204
        %2231 = vmatprep.subr.mxu0 0.0
        %2232 = vmatpush1.xpose.msra.mxu0 %v2203
        %2233 = vmatprep.subr.mxu0 0.0
        %2234 = vmatpush1.xpose.msra.mxu0 %v2202
        %2235 = vmatprep.subr.mxu0 0.0
        %2236 = vmatpush1.xpose.msra.mxu0 %v2201
        %2237 = vmatprep.subr.mxu0 0.0
        %2238 = vmatpush1.xpose.msra.mxu0 %v2200
        %2239 = vmatprep.subr.mxu0 0.0
        %2240 = vmatpush1.xpose.msra.mxu0 %v2199
        %2241 = vmatprep.subr.mxu0 0.0
        %2242 = vmatpush1.xpose.msra.mxu0 %v2198
        %2243 = vmatprep.subr.mxu0 0.0
        %2244 = vmatpush1.xpose.msra.mxu0 %v2197
        %2245 = vmatprep.subr.mxu0 0.0
        %2246 = vmatpush1.xpose.msra.mxu0 %v2196
        %2247 = vmatprep.subr.mxu0 0.0
        %2248 = vmatpush2.xpose.msra.mxu0 0.0
        %2249 = vmatprep.subr.mxu0 0.0
        %2250 = vmatpush2.xpose.msra.mxu0 0.0
        %2251 = vmatprep.subr.mxu0 0.0
        %2252 = vmatpush2.xpose.msra.mxu0 0.0
        %2253 = vmatprep.subr.mxu0 0.0
        %2254 = vmatpush2.xpose.msra.mxu0 0.0
        %2255 = vmatprep.subr.mxu0 0.0
        %2256 = vmatpush2.xpose.msra.mxu0 0.0
        %2257 = vmatprep.subr.mxu0 0.0
        %2258 = vmatpush2.xpose.msra.mxu0 0.0
        %2259 = vmatprep.subr.mxu0 0.0
        %2260 = vmatpush2.xpose.msra.mxu0 0.0
        %2261 = vmatprep.subr.mxu0 0.0
        %2262 = vmatpush2.xpose.msra.mxu0 0.0
        %2263 = vmatprep.subr.mxu0 0.0
        %2264 = vmatpush2.xpose.msra.mxu0 0.0
        %2265 = vmatprep.subr.mxu0 0.0
        %2266 = vmatpush2.xpose.msra.mxu0 0.0
        %2267 = vmatprep.subr.mxu0 0.0
        %2268 = vmatpush2.xpose.msra.mxu0 0.0
        %2269 = vmatprep.subr.mxu0 0.0
        %2270 = vmatpush2.xpose.msra.mxu0 0.0
        %2271 = vmatprep.subr.mxu0 0.0
        %2272 = vmatpush2.xpose.msra.mxu0 0.0
        %2273 = vmatprep.subr.mxu0 0.0
        %2274 = vmatpush2.xpose.msra.mxu0 0.0
        %2275 = vmatprep.subr.mxu0 0.0
        %2276 = vmatpush2.xpose.msra.mxu0 0.0
        %2277 = vmatprep.subr.mxu0 0.0
        %2278 = vmatpush2.xpose.msra.mxu0 0.0
        %2279 = vmatprep.mubr.f32.mxu0 0.0
        %2280 = vmatmul.mubr.f32.gmra.mxu0 %v2212
        %v2281 = vpop.f32.mrf.mxu0
        %v2282 = vadd.f32 %v2214, %v2281
        %v2283 = vpop.f32.mrf.mxu0
        %2284 = vdwg.mxu0
        %2285 = vst [vmem:[%s461] sm:$0x1] %v2282
        %p2286 = scmp.lt.s32.totalorder %s26, 2
        %s2287 = scalar_select %p2286, %s26, 2
        %s2288 = scalar_lea.vmem %s12, %s2287
        // Predicated region
        $region77: #{diffusion_gnn_scm_forward.1} parent=67 // pred_check
          %p2289 = pneg %p306
        $region78: #{diffusion_gnn_scm_forward.1} parent=67 // pred_check_branch
          %2291 = sbr.rel (%p2289) target = $region80
        $region79: #{diffusion_gnn_scm_forward.1} parent=67 // pred_region
          _
        $region80: #{diffusion_gnn_scm_forward.1} parent=67 // pred_fallthru
          _
      $region68: #{diffusion_gnn_scm_forward.1} parent=5 // pred_fallthru
        _
      %p2292 = scmp.le.s32.totalorder 2, %s21
      // Predicated region
      $region81: #{diffusion_gnn_scm_forward.1} parent=5 // pred_check
        %p2293 = pneg %p2292
      $region82: #{diffusion_gnn_scm_forward.1} parent=5 // pred_check_branch
        %2295 = sbr.rel (%p2293) target = $region84
      $region83: #{diffusion_gnn_scm_forward.1} parent=5 // pred_region
        %s2296 = ssub.s32 %s21, 2
        // Predicated region
        $region85: #{diffusion_gnn_scm_forward.1} parent=83 // pred_check
          %p2297 = pneg %p312
        $region86: #{diffusion_gnn_scm_forward.1} parent=83 // pred_check_branch
          %2299 = sbr.rel (%p2297) target = $region88
        $region87: #{diffusion_gnn_scm_forward.1} parent=83 // pred_region
          %p2300 = scmp.lt.s32.totalorder %s27, 2
          %s2301 = scalar_select %p2300, %s27, 2
          %s2302 = scalar_lea.vmem %s12, %s2301
        $region88: #{diffusion_gnn_scm_forward.1} parent=83 // pred_fallthru
          _
      $region84: #{diffusion_gnn_scm_forward.1} parent=5 // pred_fallthru
        _
    $region6: #{diffusion_gnn_scm_forward.1} parent=1 // loop_footer
      %s25 = sadd.s32 1, %s21
    $region7: #{diffusion_gnn_scm_forward.1} parent=1 // loop_footer_branch
      %20 = sbr.rel target = $region3
    $region8: #{diffusion_gnn_scm_forward.1} parent=1 // loop_exit
      _
    %2303 = vsyncpa [#allocation4], 1
    %s2304 = scalar_lea.sflag [#allocation4], 1
    %2305 = vsyncpa %s2304, 1
    %2306 = vsyncpa [#allocation6], 1

</llo_original>
